<compile_context>
chip_gen: v7x
topology: tpu7x:2x2x1
jax: 0.10.0
libtpu: 0.0.40
codegen_flags: <defaults>
</compile_context>

<pallas_src>
import functools

import jax
import jax.numpy as jnp
from jax.experimental import pallas as pl
from jax.experimental.pallas import tpu as pltpu


# ----------------------------------------------------------------------------
# Fused Pallas kernel (one grid step = one batch element)
# ----------------------------------------------------------------------------
def _resblock_kernel(*refs, L, Lp, downsample):
    """Fused Residual_block body.

    refs (downsample=True):
      xp_ref   (1, L+2, Cin)  bf16  zero-padded input, channels-last
      w1_ref   (3, Cin, Cout) bf16  conv1 weights (BN2 folded), tap-major
      b1_ref   (1, Cout)      f32   conv1 bias (BN2 folded)
      w2_ref   (3, Cout, Cout)bf16  conv2 weights
      b2_ref   (1, Cout)      f32
      wd_ref   (Cin, Cout)    bf16  1x1 downsample weights   [only if downsample]
      bd_ref   (1, Cout)      f32                            [only if downsample]
      o_ref    (1, Lp, Cout)  f32   pooled output
      hpad_ref (L+2, Cout)    bf16  VMEM scratch: padded conv1 activation
      obuf_ref (L, Cout)      f32   VMEM scratch: pre-pool residual sum
    """
    if downsample:
        (xp_ref, w1_ref, b1_ref, w2_ref, b2_ref, wd_ref, bd_ref,
         o_ref, hpad_ref, obuf_ref) = refs
    else:
        (xp_ref, w1_ref, b1_ref, w2_ref, b2_ref,
         o_ref, hpad_ref, obuf_ref) = refs

    cout = hpad_ref.shape[-1]
    x = xp_ref[0]                                   # (L+2, Cin) bf16

    # conv1 (k=3, pad=1) with eval-mode BatchNorm1d folded in: 3 shifted dots.
    y1 = (jnp.dot(x[0:L], w1_ref[0], preferred_element_type=jnp.float32)
          + jnp.dot(x[1:L + 1], w1_ref[1], preferred_element_type=jnp.float32)
          + jnp.dot(x[2:L + 2], w1_ref[2], preferred_element_type=jnp.float32)
          + b1_ref[...])                            # (L, Cout) f32

    # LeakyReLU(negative_slope=0.3)
    h = jnp.where(y1 > 0, y1, 0.3 * y1)

    # Zero-pad h along L inside VMEM for conv2 (no HBM round trip).
    zrow = jnp.zeros((1, cout), jnp.bfloat16)
    hpad_ref[pl.ds(0, 1), :] = zrow
    hpad_ref[pl.ds(L + 1, 1), :] = zrow
    hpad_ref[pl.ds(1, L), :] = h.astype(jnp.bfloat16)
    hp = hpad_ref[...]                              # (L+2, Cout) bf16

    # conv2 (k=3, pad=1)
    y2 = (jnp.dot(hp[0:L], w2_ref[0], preferred_element_type=jnp.float32)
          + jnp.dot(hp[1:L + 1], w2_ref[1], preferred_element_type=jnp.float32)
          + jnp.dot(hp[2:L + 2], w2_ref[2], preferred_element_type=jnp.float32)
          + b2_ref[...])                            # (L, Cout) f32

    # Residual connection.
    if downsample:
        ident = (jnp.dot(x[1:L + 1], wd_ref[...],
                         preferred_element_type=jnp.float32) + bd_ref[...])
    else:
        ident = x[1:L + 1].astype(jnp.float32)
    out = y2 + ident                                # (L, Cout) f32

    # MaxPool1d(kernel=3, stride=3) epilogue: strided row loads from scratch.
    obuf_ref[...] = out
    p0 = obuf_ref[pl.ds(0, Lp, stride=3), :]
    p1 = obuf_ref[pl.ds(1, Lp, stride=3), :]
    p2 = obuf_ref[pl.ds(2, Lp, stride=3), :]
    o_ref[0] = jnp.maximum(jnp.maximum(p0, p1), p2)


# ----------------------------------------------------------------------------
# One-time parameter prep (hoisted out of the forward)
# ----------------------------------------------------------------------------
def prep_params(params, *, downsample, eps=1e-5):
    """Channels-last weight layout, eval-mode bn2 folded into conv1, bf16 cast."""
    s = params["bn2_gamma"] / jnp.sqrt(params["bn2_var"] + eps)       # (Cout,)
    w1 = jnp.transpose(params["conv1_w"], (2, 1, 0)) * s[None, None, :]  # (3,Cin,Cout)
    b1 = (params["conv1_b"] - params["bn2_mean"]) * s + params["bn2_beta"]
    w2 = jnp.transpose(params["conv2_w"], (2, 1, 0))                  # (3,Cout,Cout)
    b2 = params["conv2_b"]
    prepped = {
        "w1": w1.astype(jnp.bfloat16),
        "b1": b1.reshape(1, -1).astype(jnp.float32),
        "w2": w2.astype(jnp.bfloat16),
        "b2": b2.reshape(1, -1).astype(jnp.float32),
    }
    if downsample:
        prepped["wd"] = params["convd_w"][:, :, 0].T.astype(jnp.bfloat16)
        prepped["bd"] = params["convd_b"].reshape(1, -1).astype(jnp.float32)
    return prepped


# ----------------------------------------------------------------------------
# Forward wrapper
# ----------------------------------------------------------------------------
def residual_block_forward(x_ncl, prepped, *, downsample):
    """x_ncl: (B, Cin, L) f32 (PyTorch Conv1d layout) -> (B, Cout, L // 3) f32."""
    B, Cin, L = x_ncl.shape
    Cout = prepped["w1"].shape[-1]
    Lp = L // 3

    # channels-last + conv zero padding along L; bf16 MXU operands.
    x = jnp.transpose(x_ncl, (0, 2, 1))
    xp = jnp.pad(x, ((0, 0), (1, 1), (0, 0))).astype(jnp.bfloat16)   # (B, L+2, Cin)

    full3 = lambda b: (0, 0, 0)
    full2 = lambda b: (0, 0)
    in_specs = [
        pl.BlockSpec((1, L + 2, Cin), lambda b: (b, 0, 0)),
        pl.BlockSpec((3, Cin, Cout), full3),
        pl.BlockSpec((1, Cout), full2),
        pl.BlockSpec((3, Cout, Cout), full3),
        pl.BlockSpec((1, Cout), full2),
    ]
    operands = [xp, prepped["w1"], prepped["b1"], prepped["w2"], prepped["b2"]]
    if downsample:
        in_specs += [pl.BlockSpec((Cin, Cout), full2),
                     pl.BlockSpec((1, Cout), full2)]
        operands += [prepped["wd"], prepped["bd"]]

    kernel = functools.partial(_resblock_kernel, L=L, Lp=Lp,
                               downsample=downsample)
    out = pl.pallas_call(
        kernel,
        out_shape=jax.ShapeDtypeStruct((B, Lp, Cout), jnp.float32),
        grid=(B,),
        in_specs=in_specs,
        out_specs=pl.BlockSpec((1, Lp, Cout), lambda b: (b, 0, 0)),
        scratch_shapes=[pltpu.VMEM((L + 2, Cout), jnp.bfloat16),
                        pltpu.VMEM((L, Cout), jnp.float32)],
        compiler_params=pltpu.CompilerParams(
            dimension_semantics=("parallel",)),
    )(*operands)
    return jnp.transpose(out, (0, 2, 1))       # back to (B, Cout, Lp) like PyTorch


# ----------------------------------------------------------------------------
# Pure-JAX f32 reference (mirrors the PyTorch forward, eval mode)
# ----------------------------------------------------------------------------
def residual_block_ref(x, params, *, downsample, eps=1e-5):
    def conv1d(z, w, b, pad):
        y = jax.lax.conv_general_dilated(
            z, w, window_strides=(1,), padding=[(pad, pad)],
            dimension_numbers=("NCH", "OIH", "NCH"))
        return y + b[None, :, None]

    # (bn1 + lrelu result is discarded by the original forward -> skipped.)
    out = conv1d(x, params["conv1_w"], params["conv1_b"], 1)
    s = params["bn2_gamma"] / jnp.sqrt(params["bn2_var"] + eps)
    out = ((out - params["bn2_mean"][None, :, None]) * s[None, :, None]
           + params["bn2_beta"][None, :, None])
    out = jnp.where(out > 0, out, 0.3 * out)
    out = conv1d(out, params["conv2_w"], params["conv2_b"], 1)
    identity = (conv1d(x, params["convd_w"], params["convd_b"], 0)
                if downsample else x)
    out = out + identity
    B, C, L = out.shape
    Lp = L // 3
    return out[:, :, :3 * Lp].reshape(B, C, Lp, 3).max(axis=-1)


# ----------------------------------------------------------------------------
# Synthetic parameters + demo
# ----------------------------------------------------------------------------
def _make_params(key, cin, cout):
    ks = jax.random.split(key, 10)
    p = {
        "conv1_w": 0.1 * jax.random.normal(ks[0], (cout, cin, 3), jnp.float32),
        "conv1_b": 0.1 * jax.random.normal(ks[1], (cout,), jnp.float32),
        "conv2_w": 0.1 * jax.random.normal(ks[2], (cout, cout, 3), jnp.float32),
        "conv2_b": 0.1 * jax.random.normal(ks[3], (cout,), jnp.float32),
        "bn2_gamma": 1.0 + 0.1 * jax.random.normal(ks[4], (cout,), jnp.float32),
        "bn2_beta": 0.1 * jax.random.normal(ks[5], (cout,), jnp.float32),
        "bn2_mean": 0.1 * jax.random.normal(ks[6], (cout,), jnp.float32),
        "bn2_var": 1.0 + 0.1 * jax.random.uniform(ks[7], (cout,), jnp.float32),
    }
    if cin != cout:
        p["convd_w"] = 0.1 * jax.random.normal(ks[8], (cout, cin, 1), jnp.float32)
        p["convd_b"] = 0.1 * jax.random.normal(ks[9], (cout,), jnp.float32)
    return p


if __name__ == "__main__":
    B, CIN, L = 2, 32, 96                       # small shapes; pool -> L//3 = 32
    key = jax.random.PRNGKey(0)
    k_x, k_p1, k_p2 = jax.random.split(key, 3)
    x = jax.random.normal(k_x, (B, CIN, L), jnp.float32)

    # Two stacked blocks: (32 -> 64, with downsample) then (64 -> 64, identity).
    configs = [((32, 64), k_p1), ((64, 64), k_p2)]
    inp = x
    for (cin, cout), kp in configs:
        params = _make_params(kp, cin, cout)
        downsample = cin != cout
        prepped = prep_params(params, downsample=downsample)
        fwd = jax.jit(functools.partial(residual_block_forward,
                                        downsample=downsample))
        out = fwd(inp, prepped)
        jax.block_until_ready(out)
        ref = residual_block_ref(inp, params, downsample=downsample)
        assert out.shape == ref.shape == (B, cout, inp.shape[-1] // 3)
        max_err = float(jnp.max(jnp.abs(out - ref)))
        # bf16 MXU operands vs f32 reference -> loose tolerance.
        assert max_err < 1e-1, f"max abs error too large: {max_err}"
        inp = out

    print("KERNEL_OK")
</pallas_src>

<mosaic_0001>
module attributes {stable_mosaic.version = 11 : i64} {
  func.func @_resblock_kernel(%arg0: i32, %arg1: memref<1x98x32xbf16, #tpu.memory_space<vmem>>, %arg2: memref<3x32x64xbf16, #tpu.memory_space<vmem>>, %arg3: memref<1x64xf32, #tpu.memory_space<vmem>>, %arg4: memref<3x64x64xbf16, #tpu.memory_space<vmem>>, %arg5: memref<1x64xf32, #tpu.memory_space<vmem>>, %arg6: memref<32x64xbf16, #tpu.memory_space<vmem>>, %arg7: memref<1x64xf32, #tpu.memory_space<vmem>>, %arg8: memref<1x32x64xf32, #tpu.memory_space<vmem>>, %arg9: memref<98x64xbf16, #tpu.memory_space<vmem>>, %arg10: memref<96x64xf32, #tpu.memory_space<vmem>>) attributes {dimension_semantics = [#tpu.dimension_semantics<parallel>], iteration_bounds = array<i64: 2>, scalar_prefetch = 0 : i64, scratch_operands = 2 : i64, tpu.core_type = #tpu.core_type<tc>, window_params = [{transform_indices = @transform_0, window_bounds = array<i64: 1, 98, 32>}, {pipeline_mode = #tpu.pipeline_mode<synchronous>, transform_indices = @transform_1, window_bounds = array<i64: 3, 32, 64>}, {pipeline_mode = #tpu.pipeline_mode<synchronous>, transform_indices = @transform_2, window_bounds = array<i64: 1, 64>}, {pipeline_mode = #tpu.pipeline_mode<synchronous>, transform_indices = @transform_3, window_bounds = array<i64: 3, 64, 64>}, {pipeline_mode = #tpu.pipeline_mode<synchronous>, transform_indices = @transform_4, window_bounds = array<i64: 1, 64>}, {pipeline_mode = #tpu.pipeline_mode<synchronous>, transform_indices = @transform_5, window_bounds = array<i64: 32, 64>}, {pipeline_mode = #tpu.pipeline_mode<synchronous>, transform_indices = @transform_6, window_bounds = array<i64: 1, 64>}, {transform_indices = @transform_7, window_bounds = array<i64: 1, 32, 64>}]} {
    %c0 = arith.constant 0 : index
    %c0_0 = arith.constant 0 : index
    %c0_1 = arith.constant 0 : index
    %0 = vector.load %arg1[%c0, %c0_0, %c0_1] : memref<1x98x32xbf16, #tpu.memory_space<vmem>>, vector<1x98x32xbf16>
    %1 = vector.shape_cast %0 : vector<1x98x32xbf16> to vector<98x32xbf16>
    %2 = vector.extract_strided_slice %1 {offsets = [0, 0], sizes = [96, 32], strides = [1, 1]} : vector<98x32xbf16> to vector<96x32xbf16>
    %c0_2 = arith.constant 0 : index
    %c0_3 = arith.constant 0 : index
    %c0_4 = arith.constant 0 : index
    %3 = vector.load %arg2[%c0_2, %c0_3, %c0_4] : memref<3x32x64xbf16, #tpu.memory_space<vmem>>, vector<1x32x64xbf16>
    %4 = vector.shape_cast %3 : vector<1x32x64xbf16> to vector<32x64xbf16>
    %cst = arith.constant dense<0.000000e+00> : vector<96x64xf32>
    %5 = tpu.matmul %2, %4, %cst {dimension_numbers = #tpu.dot_dimension_numbers<[1], [0], [0], [1], [0, 0, 1, 1], [], []>} : vector<96x32xbf16>, vector<32x64xbf16>, vector<96x64xf32> -> vector<96x64xf32>
    %6 = vector.extract_strided_slice %1 {offsets = [1, 0], sizes = [96, 32], strides = [1, 1]} : vector<98x32xbf16> to vector<96x32xbf16>
    %c1 = arith.constant 1 : index
    %c0_5 = arith.constant 0 : index
    %c0_6 = arith.constant 0 : index
    %7 = vector.load %arg2[%c1, %c0_5, %c0_6] : memref<3x32x64xbf16, #tpu.memory_space<vmem>>, vector<1x32x64xbf16>
    %8 = vector.shape_cast %7 : vector<1x32x64xbf16> to vector<32x64xbf16>
    %cst_7 = arith.constant dense<0.000000e+00> : vector<96x64xf32>
    %9 = tpu.matmul %6, %8, %cst_7 {dimension_numbers = #tpu.dot_dimension_numbers<[1], [0], [0], [1], [0, 0, 1, 1], [], []>} : vector<96x32xbf16>, vector<32x64xbf16>, vector<96x64xf32> -> vector<96x64xf32>
    %10 = arith.addf %5, %9 : vector<96x64xf32>
    %11 = vector.extract_strided_slice %1 {offsets = [2, 0], sizes = [96, 32], strides = [1, 1]} : vector<98x32xbf16> to vector<96x32xbf16>
    %c2 = arith.constant 2 : index
    %c0_8 = arith.constant 0 : index
    %c0_9 = arith.constant 0 : index
    %12 = vector.load %arg2[%c2, %c0_8, %c0_9] : memref<3x32x64xbf16, #tpu.memory_space<vmem>>, vector<1x32x64xbf16>
    %13 = vector.shape_cast %12 : vector<1x32x64xbf16> to vector<32x64xbf16>
    %cst_10 = arith.constant dense<0.000000e+00> : vector<96x64xf32>
    %14 = tpu.matmul %11, %13, %cst_10 {dimension_numbers = #tpu.dot_dimension_numbers<[1], [0], [0], [1], [0, 0, 1, 1], [], []>} : vector<96x32xbf16>, vector<32x64xbf16>, vector<96x64xf32> -> vector<96x64xf32>
    %15 = arith.addf %10, %14 : vector<96x64xf32>
    %c0_11 = arith.constant 0 : index
    %c0_12 = arith.constant 0 : index
    %16 = vector.load %arg3[%c0_11, %c0_12] : memref<1x64xf32, #tpu.memory_space<vmem>>, vector<1x64xf32>
    %17 = vector.broadcast %16 : vector<1x64xf32> to vector<96x64xf32>
    %18 = arith.addf %15, %17 : vector<96x64xf32>
    %cst_13 = arith.constant 0.000000e+00 : f32
    %19 = vector.broadcast %cst_13 : f32 to vector<96x64xf32>
    %20 = arith.cmpf ogt, %18, %19 : vector<96x64xf32>
    %cst_14 = arith.constant 3.000000e-01 : f32
    %21 = vector.broadcast %cst_14 : f32 to vector<96x64xf32>
    %22 = arith.mulf %21, %18 : vector<96x64xf32>
    %23 = arith.select %20, %18, %22 : vector<96x64xi1>, vector<96x64xf32>
    %cst_15 = arith.constant 0.000000e+00 : bf16
    %24 = vector.broadcast %cst_15 : bf16 to vector<1x64xbf16>
    %c0_16 = arith.constant 0 : index
    %c0_17 = arith.constant 0 : index
    %25 = vector.load %arg9[%c0_16, %c0_17] : memref<98x64xbf16, #tpu.memory_space<vmem>>, vector<1x64xbf16>
    tpu.vector_store %arg9[%c0_16, %c0_17], %24 {strides = array<i32>} : memref<98x64xbf16, #tpu.memory_space<vmem>>, vector<1x64xbf16>,
    %c97 = arith.constant 97 : index
    %c0_18 = arith.constant 0 : index
    %26 = vector.load %arg9[%c97, %c0_18] : memref<98x64xbf16, #tpu.memory_space<vmem>>, vector<1x64xbf16>
    tpu.vector_store %arg9[%c97, %c0_18], %24 {strides = array<i32>} : memref<98x64xbf16, #tpu.memory_space<vmem>>, vector<1x64xbf16>,
    %27 = arith.truncf %23 : vector<96x64xf32> to vector<96x64xbf16>
    %c1_19 = arith.constant 1 : index
    %c0_20 = arith.constant 0 : index
    %28 = vector.load %arg9[%c1_19, %c0_20] : memref<98x64xbf16, #tpu.memory_space<vmem>>, vector<96x64xbf16>
    tpu.vector_store %arg9[%c1_19, %c0_20], %27 {strides = array<i32>} : memref<98x64xbf16, #tpu.memory_space<vmem>>, vector<96x64xbf16>,
    %c0_21 = arith.constant 0 : index
    %c0_22 = arith.constant 0 : index
    %29 = vector.load %arg9[%c0_21, %c0_22] : memref<98x64xbf16, #tpu.memory_space<vmem>>, vector<98x64xbf16>
    %30 = vector.extract_strided_slice %29 {offsets = [0, 0], sizes = [96, 64], strides = [1, 1]} : vector<98x64xbf16> to vector<96x64xbf16>
    %c0_23 = arith.constant 0 : index
    %c0_24 = arith.constant 0 : index
    %c0_25 = arith.constant 0 : index
    %31 = vector.load %arg4[%c0_23, %c0_24, %c0_25] : memref<3x64x64xbf16, #tpu.memory_space<vmem>>, vector<1x64x64xbf16>
    %32 = vector.shape_cast %31 : vector<1x64x64xbf16> to vector<64x64xbf16>
    %cst_26 = arith.constant dense<0.000000e+00> : vector<96x64xf32>
    %33 = tpu.matmul %30, %32, %cst_26 {dimension_numbers = #tpu.dot_dimension_numbers<[1], [0], [0], [1], [0, 0, 1, 1], [], []>} : vector<96x64xbf16>, vector<64x64xbf16>, vector<96x64xf32> -> vector<96x64xf32>
    %34 = vector.extract_strided_slice %29 {offsets = [1, 0], sizes = [96, 64], strides = [1, 1]} : vector<98x64xbf16> to vector<96x64xbf16>
    %c1_27 = arith.constant 1 : index
    %c0_28 = arith.constant 0 : index
    %c0_29 = arith.constant 0 : index
    %35 = vector.load %arg4[%c1_27, %c0_28, %c0_29] : memref<3x64x64xbf16, #tpu.memory_space<vmem>>, vector<1x64x64xbf16>
    %36 = vector.shape_cast %35 : vector<1x64x64xbf16> to vector<64x64xbf16>
    %cst_30 = arith.constant dense<0.000000e+00> : vector<96x64xf32>
    %37 = tpu.matmul %34, %36, %cst_30 {dimension_numbers = #tpu.dot_dimension_numbers<[1], [0], [0], [1], [0, 0, 1, 1], [], []>} : vector<96x64xbf16>, vector<64x64xbf16>, vector<96x64xf32> -> vector<96x64xf32>
    %38 = arith.addf %33, %37 : vector<96x64xf32>
    %39 = vector.extract_strided_slice %29 {offsets = [2, 0], sizes = [96, 64], strides = [1, 1]} : vector<98x64xbf16> to vector<96x64xbf16>
    %c2_31 = arith.constant 2 : index
    %c0_32 = arith.constant 0 : index
    %c0_33 = arith.constant 0 : index
    %40 = vector.load %arg4[%c2_31, %c0_32, %c0_33] : memref<3x64x64xbf16, #tpu.memory_space<vmem>>, vector<1x64x64xbf16>
    %41 = vector.shape_cast %40 : vector<1x64x64xbf16> to vector<64x64xbf16>
    %cst_34 = arith.constant dense<0.000000e+00> : vector<96x64xf32>
    %42 = tpu.matmul %39, %41, %cst_34 {dimension_numbers = #tpu.dot_dimension_numbers<[1], [0], [0], [1], [0, 0, 1, 1], [], []>} : vector<96x64xbf16>, vector<64x64xbf16>, vector<96x64xf32> -> vector<96x64xf32>
    %43 = arith.addf %38, %42 : vector<96x64xf32>
    %c0_35 = arith.constant 0 : index
    %c0_36 = arith.constant 0 : index
    %44 = vector.load %arg5[%c0_35, %c0_36] : memref<1x64xf32, #tpu.memory_space<vmem>>, vector<1x64xf32>
    %45 = vector.broadcast %44 : vector<1x64xf32> to vector<96x64xf32>
    %46 = arith.addf %43, %45 : vector<96x64xf32>
    %47 = vector.extract_strided_slice %1 {offsets = [1, 0], sizes = [96, 32], strides = [1, 1]} : vector<98x32xbf16> to vector<96x32xbf16>
    %c0_37 = arith.constant 0 : index
    %c0_38 = arith.constant 0 : index
    %48 = vector.load %arg6[%c0_37, %c0_38] : memref<32x64xbf16, #tpu.memory_space<vmem>>, vector<32x64xbf16>
    %cst_39 = arith.constant dense<0.000000e+00> : vector<96x64xf32>
    %49 = tpu.matmul %47, %48, %cst_39 {dimension_numbers = #tpu.dot_dimension_numbers<[1], [0], [0], [1], [0, 0, 1, 1], [], []>} : vector<96x32xbf16>, vector<32x64xbf16>, vector<96x64xf32> -> vector<96x64xf32>
    %c0_40 = arith.constant 0 : index
    %c0_41 = arith.constant 0 : index
    %50 = vector.load %arg7[%c0_40, %c0_41] : memref<1x64xf32, #tpu.memory_space<vmem>>, vector<1x64xf32>
    %51 = vector.broadcast %50 : vector<1x64xf32> to vector<96x64xf32>
    %52 = arith.addf %49, %51 : vector<96x64xf32>
    %53 = arith.addf %46, %52 : vector<96x64xf32>
    %c0_42 = arith.constant 0 : index
    %c0_43 = arith.constant 0 : index
    %54 = vector.load %arg10[%c0_42, %c0_43] : memref<96x64xf32, #tpu.memory_space<vmem>>, vector<96x64xf32>
    tpu.vector_store %arg10[%c0_42, %c0_43], %53 {strides = array<i32>} : memref<96x64xf32, #tpu.memory_space<vmem>>, vector<96x64xf32>,
    %c0_44 = arith.constant 0 : index
    %c0_45 = arith.constant 0 : index
    %55 = tpu.strided_load %arg10[%c0_44, %c0_45] {strides = array<i32: 3, 1>} : memref<96x64xf32, #tpu.memory_space<vmem>>, vector<32x64xf32>
    %c1_46 = arith.constant 1 : index
    %c0_47 = arith.constant 0 : index
    %56 = tpu.strided_load %arg10[%c1_46, %c0_47] {strides = array<i32: 3, 1>} : memref<96x64xf32, #tpu.memory_space<vmem>>, vector<32x64xf32>
    %c2_48 = arith.constant 2 : index
    %c0_49 = arith.constant 0 : index
    %57 = tpu.strided_load %arg10[%c2_48, %c0_49] {strides = array<i32: 3, 1>} : memref<96x64xf32, #tpu.memory_space<vmem>>, vector<32x64xf32>
    %58 = arith.maximumf %55, %56 : vector<32x64xf32>
    %59 = arith.maximumf %58, %57 : vector<32x64xf32>
    %c0_50 = arith.constant 0 : index
    %c0_51 = arith.constant 0 : index
    %c0_52 = arith.constant 0 : index
    %60 = vector.load %arg8[%c0_50, %c0_51, %c0_52] : memref<1x32x64xf32, #tpu.memory_space<vmem>>, vector<1x32x64xf32>
    %61 = vector.shape_cast %60 : vector<1x32x64xf32> to vector<32x64xf32>
    %62 = vector.shape_cast %59 : vector<32x64xf32> to vector<1x32x64xf32>
    tpu.vector_store %arg8[%c0_50, %c0_51, %c0_52], %62 {strides = array<i32>} : memref<1x32x64xf32, #tpu.memory_space<vmem>>, vector<1x32x64xf32>,
    return
  }
  func.func @transform_0(%arg0: i32) -> (i32, i32, i32) {
    %c0_i32 = arith.constant 0 : i32
    %c0_i32_0 = arith.constant 0 : i32
    %c0_i32_1 = arith.constant 0 : i32
    return %arg0, %c0_i32, %c0_i32_0 : i32, i32, i32
  }
  func.func @transform_1(%arg0: i32) -> (i32, i32, i32) {
    %c0_i32 = arith.constant 0 : i32
    %c0_i32_0 = arith.constant 0 : i32
    %c0_i32_1 = arith.constant 0 : i32
    %c0_i32_2 = arith.constant 0 : i32
    return %c0_i32, %c0_i32_0, %c0_i32_1 : i32, i32, i32
  }
  func.func @transform_2(%arg0: i32) -> (i32, i32) {
    %c0_i32 = arith.constant 0 : i32
    %c0_i32_0 = arith.constant 0 : i32
    %c0_i32_1 = arith.constant 0 : i32
    return %c0_i32, %c0_i32_0 : i32, i32
  }
  func.func @transform_3(%arg0: i32) -> (i32, i32, i32) {
    %c0_i32 = arith.constant 0 : i32
    %c0_i32_0 = arith.constant 0 : i32
    %c0_i32_1 = arith.constant 0 : i32
    %c0_i32_2 = arith.constant 0 : i32
    return %c0_i32, %c0_i32_0, %c0_i32_1 : i32, i32, i32
  }
  func.func @transform_4(%arg0: i32) -> (i32, i32) {
    %c0_i32 = arith.constant 0 : i32
    %c0_i32_0 = arith.constant 0 : i32
    %c0_i32_1 = arith.constant 0 : i32
    return %c0_i32, %c0_i32_0 : i32, i32
  }
  func.func @transform_5(%arg0: i32) -> (i32, i32) {
    %c0_i32 = arith.constant 0 : i32
    %c0_i32_0 = arith.constant 0 : i32
    %c0_i32_1 = arith.constant 0 : i32
    return %c0_i32, %c0_i32_0 : i32, i32
  }
  func.func @transform_6(%arg0: i32) -> (i32, i32) {
    %c0_i32 = arith.constant 0 : i32
    %c0_i32_0 = arith.constant 0 : i32
    %c0_i32_1 = arith.constant 0 : i32
    return %c0_i32, %c0_i32_0 : i32, i32
  }
  func.func @transform_7(%arg0: i32) -> (i32, i32, i32) {
    %c0_i32 = arith.constant 0 : i32
    %c0_i32_0 = arith.constant 0 : i32
    %c0_i32_1 = arith.constant 0 : i32
    return %arg0, %c0_i32, %c0_i32_0 : i32, i32, i32
  }
}

</mosaic_0001>

<llo_original>
// kernel: residual_block_forward.1
$region0: #{residual_block_forward.1}
  #allocation0 [shape = 'u32[]', space=smem, size = 0x4, offset = 0x4, fixed_abs, tag = 'smem constant byte address 0x4 - core index']
  #allocation1 [shape = 'u32[144,128]{1,0:T(1,128)}', space=vmem, size = 0x12000, scoped, tag = 'internal scratch']
  #allocation2 [shape = 'bf16[98,64]{1,0:T(8,128)(2,1)}', space=vmem, size = 0x6800, scoped, tag = 'scratch operand']
  #allocation3 [shape = 'f32[96,64]{1,0:T(8,128)}', space=vmem, size = 0xc000, scoped, tag = 'scratch operand']
  %s0 = inlined_call_operand.vmem [shape: bf16[2,98,32], index: 0, kind: input, shape index: {}]
  %s1 = inlined_call_operand.vmem [shape: bf16[3,32,64], index: 1, kind: input, shape index: {}]
  %s2 = inlined_call_operand.vmem [shape: f32[1,64], index: 2, kind: input, shape index: {}]
  %s3 = inlined_call_operand.vmem [shape: bf16[3,64,64], index: 3, kind: input, shape index: {}]
  %s4 = inlined_call_operand.vmem [shape: f32[1,64], index: 4, kind: input, shape index: {}]
  %s5 = inlined_call_operand.vmem [shape: bf16[32,64], index: 5, kind: input, shape index: {}]
  %s6 = inlined_call_operand.vmem [shape: f32[1,64], index: 6, kind: input, shape index: {}]
  %s7 = inlined_call_operand.hbm [shape: f32[2,32,64], index: 7, kind: output, shape index: {}]
  %s8 = sld [smem:[#allocation0]]
  $region61: #{residual_block_forward.1} parent=0
    _
  %s10 = ssub.s32 1, %s8
  %s11 = scalar_select 0, %s10, %s8
  $region1: #{residual_block_forward.1} parent=0
    #allocation4 [shape = 'u8[32768]{0}', space=vmem, size = 0x8000, scoped, tag = 'output window, operand 0']
    #allocation5 [shape = 's32[2]{0}', space=sflag, size = 0x8, scoped, tag = 'scoped memory for residual_block_forward.1']
    %12 = vsyncpa [#allocation5], 0
    %s13 = scalar_lea.sflag [#allocation5], 1
    %14 = vsyncpa %s13, 0
    loop: start=0, step=1, limit=4
    $region2: #{residual_block_forward.1} parent=1 // loop_pre_header
      _
    $region3: #{residual_block_forward.1} parent=1 // loop_header
      %s16 = sphi 0, %s20
      %p17 = scmp.ge.s32.totalorder %s16, 4
      %s26 = sphi 0, %s28
      %s29 = sphi 0, %s26
      %s30 = sphi 0, %s29
      %s46 = sphi 0, %s30
      %s50 = sphi 0, %s50
      %s52 = sphi 0, %s50
      %s53 = sphi 0, %s52
      %s67 = sphi 0, %s53
      %s71 = sphi 0, %s71
      %s73 = sphi 0, %s71
      %s74 = sphi 0, %s73
      %s88 = sphi 0, %s74
      %s92 = sphi 0, %s92
      %s94 = sphi 0, %s92
      %s95 = sphi 0, %s94
      %s109 = sphi 0, %s95
      %s113 = sphi 0, %s113
      %s115 = sphi 0, %s113
      %s116 = sphi 0, %s115
      %s130 = sphi 0, %s116
      %s134 = sphi 0, %s134
      %s136 = sphi 0, %s134
      %s137 = sphi 0, %s136
      %s151 = sphi 0, %s137
      %s155 = sphi 0, %s155
      %s157 = sphi 0, %s155
      %s158 = sphi 0, %s157
      %s172 = sphi 0, %s158
      %s178 = sphi 0, %s180
      %s181 = sphi 0, %s178
      %s182 = sphi 0, %s181
      %s198 = sphi 0, %s182
    $region4: #{residual_block_forward.1} parent=1 // loop_header_branch
      %19 = sbr.rel (%p17) target = $region8
    $region5: #{residual_block_forward.1} parent=1 // loop_body
      %s21 = ssub.s32 %s16, 1
      %s22 = ssub.s32 %s16, 2
      %s23 = sadd.s32 %s16, 1
      %s24 = ssub.s32 %s16, %s23
      %p25 = scmp.eq.s32.totalorder %s24, 0
      %s27 = sadd.s32 %s26, 1
      %s28 = scalar_select %p25, %s26, %s27
      %p31 = pneg %p25
      %p32 = scmp.eq.s32.totalorder %s16, 1
      %p33 = por %p31, %p32
      %p34 = scmp.ne.s32.totalorder %s26, %s29
      %p35 = scmp.eq.s32.totalorder %s16, 0
      %p36 = por %p34, %p35
      %p37 = scmp.ne.s32.totalorder %s26, %s29
      %p38 = scmp.eq.s32.totalorder %s21, 1
      %p39 = por %p37, %p38
      %p40 = scmp.ne.s32.totalorder %s29, %s30
      %p41 = scmp.eq.s32.totalorder %s21, 0
      %p42 = por %p40, %p41
      %p43 = scmp.ne.s32.totalorder %s29, %s30
      %p44 = scmp.eq.s32.totalorder %s22, 1
      %p45 = por %p43, %p44
      %p47 = scmp.ne.s32.totalorder %s30, %s46
      %p48 = scmp.eq.s32.totalorder %s22, 0
      %p49 = por %p47, %p48
      %s51 = sadd.s32 %s50, 1
      %p54 = scmp.eq.s32.totalorder %s16, 1
      %p55 = scmp.ne.s32.totalorder %s50, %s52
      %p56 = scmp.eq.s32.totalorder %s16, 0
      %p57 = por %p55, %p56
      %p58 = scmp.ne.s32.totalorder %s50, %s52
      %p59 = scmp.eq.s32.totalorder %s21, 1
      %p60 = por %p58, %p59
      %p61 = scmp.ne.s32.totalorder %s52, %s53
      %p62 = scmp.eq.s32.totalorder %s21, 0
      %p63 = por %p61, %p62
      %p64 = scmp.ne.s32.totalorder %s52, %s53
      %p65 = scmp.eq.s32.totalorder %s22, 1
      %p66 = por %p64, %p65
      %p68 = scmp.ne.s32.totalorder %s53, %s67
      %p69 = scmp.eq.s32.totalorder %s22, 0
      %p70 = por %p68, %p69
      %s72 = sadd.s32 %s71, 1
      %p75 = scmp.eq.s32.totalorder %s16, 1
      %p76 = scmp.ne.s32.totalorder %s71, %s73
      %p77 = scmp.eq.s32.totalorder %s16, 0
      %p78 = por %p76, %p77
      %p79 = scmp.ne.s32.totalorder %s71, %s73
      %p80 = scmp.eq.s32.totalorder %s21, 1
      %p81 = por %p79, %p80
      %p82 = scmp.ne.s32.totalorder %s73, %s74
      %p83 = scmp.eq.s32.totalorder %s21, 0
      %p84 = por %p82, %p83
      %p85 = scmp.ne.s32.totalorder %s73, %s74
      %p86 = scmp.eq.s32.totalorder %s22, 1
      %p87 = por %p85, %p86
      %p89 = scmp.ne.s32.totalorder %s74, %s88
      %p90 = scmp.eq.s32.totalorder %s22, 0
      %p91 = por %p89, %p90
      %s93 = sadd.s32 %s92, 1
      %p96 = scmp.eq.s32.totalorder %s16, 1
      %p97 = scmp.ne.s32.totalorder %s92, %s94
      %p98 = scmp.eq.s32.totalorder %s16, 0
      %p99 = por %p97, %p98
      %p100 = scmp.ne.s32.totalorder %s92, %s94
      %p101 = scmp.eq.s32.totalorder %s21, 1
      %p102 = por %p100, %p101
      %p103 = scmp.ne.s32.totalorder %s94, %s95
      %p104 = scmp.eq.s32.totalorder %s21, 0
      %p105 = por %p103, %p104
      %p106 = scmp.ne.s32.totalorder %s94, %s95
      %p107 = scmp.eq.s32.totalorder %s22, 1
      %p108 = por %p106, %p107
      %p110 = scmp.ne.s32.totalorder %s95, %s109
      %p111 = scmp.eq.s32.totalorder %s22, 0
      %p112 = por %p110, %p111
      %s114 = sadd.s32 %s113, 1
      %p117 = scmp.eq.s32.totalorder %s16, 1
      %p118 = scmp.ne.s32.totalorder %s113, %s115
      %p119 = scmp.eq.s32.totalorder %s16, 0
      %p120 = por %p118, %p119
      %p121 = scmp.ne.s32.totalorder %s113, %s115
      %p122 = scmp.eq.s32.totalorder %s21, 1
      %p123 = por %p121, %p122
      %p124 = scmp.ne.s32.totalorder %s115, %s116
      %p125 = scmp.eq.s32.totalorder %s21, 0
      %p126 = por %p124, %p125
      %p127 = scmp.ne.s32.totalorder %s115, %s116
      %p128 = scmp.eq.s32.totalorder %s22, 1
      %p129 = por %p127, %p128
      %p131 = scmp.ne.s32.totalorder %s116, %s130
      %p132 = scmp.eq.s32.totalorder %s22, 0
      %p133 = por %p131, %p132
      %s135 = sadd.s32 %s134, 1
      %p138 = scmp.eq.s32.totalorder %s16, 1
      %p139 = scmp.ne.s32.totalorder %s134, %s136
      %p140 = scmp.eq.s32.totalorder %s16, 0
      %p141 = por %p139, %p140
      %p142 = scmp.ne.s32.totalorder %s134, %s136
      %p143 = scmp.eq.s32.totalorder %s21, 1
      %p144 = por %p142, %p143
      %p145 = scmp.ne.s32.totalorder %s136, %s137
      %p146 = scmp.eq.s32.totalorder %s21, 0
      %p147 = por %p145, %p146
      %p148 = scmp.ne.s32.totalorder %s136, %s137
      %p149 = scmp.eq.s32.totalorder %s22, 1
      %p150 = por %p148, %p149
      %p152 = scmp.ne.s32.totalorder %s137, %s151
      %p153 = scmp.eq.s32.totalorder %s22, 0
      %p154 = por %p152, %p153
      %s156 = sadd.s32 %s155, 1
      %p159 = scmp.eq.s32.totalorder %s16, 1
      %p160 = scmp.ne.s32.totalorder %s155, %s157
      %p161 = scmp.eq.s32.totalorder %s16, 0
      %p162 = por %p160, %p161
      %p163 = scmp.ne.s32.totalorder %s155, %s157
      %p164 = scmp.eq.s32.totalorder %s21, 1
      %p165 = por %p163, %p164
      %p166 = scmp.ne.s32.totalorder %s157, %s158
      %p167 = scmp.eq.s32.totalorder %s21, 0
      %p168 = por %p166, %p167
      %p169 = scmp.ne.s32.totalorder %s157, %s158
      %p170 = scmp.eq.s32.totalorder %s22, 1
      %p171 = por %p169, %p170
      %p173 = scmp.ne.s32.totalorder %s158, %s172
      %p174 = scmp.eq.s32.totalorder %s22, 0
      %p175 = por %p173, %p174
      %s176 = ssub.s32 %s16, %s23
      %p177 = scmp.eq.s32.totalorder %s176, 0
      %s179 = sadd.s32 %s178, 1
      %s180 = scalar_select %p177, %s178, %s179
      %p183 = pneg %p177
      %p184 = scmp.eq.s32.totalorder %s16, 1
      %p185 = por %p183, %p184
      %p186 = scmp.ne.s32.totalorder %s178, %s181
      %p187 = scmp.eq.s32.totalorder %s16, 0
      %p188 = por %p186, %p187
      %p189 = scmp.ne.s32.totalorder %s178, %s181
      %p190 = scmp.eq.s32.totalorder %s21, 1
      %p191 = por %p189, %p190
      %p192 = scmp.ne.s32.totalorder %s181, %s182
      %p193 = scmp.eq.s32.totalorder %s21, 0
      %p194 = por %p192, %p193
      %p195 = scmp.ne.s32.totalorder %s181, %s182
      %p196 = scmp.eq.s32.totalorder %s22, 1
      %p197 = por %p195, %p196
      %p199 = scmp.ne.s32.totalorder %s182, %s198
      %p200 = scmp.eq.s32.totalorder %s22, 0
      %p201 = por %p199, %p200
      %p202 = scmp.le.s32.totalorder 1, %s16
      %p203 = scmp.lt.s32.totalorder %s16, 3
      %p204 = pnand %p202, %p203
      %p205 = pneg %p204
      // Predicated region
      $region9: #{residual_block_forward.1} parent=5 // pred_check
        _
      $region10: #{residual_block_forward.1} parent=5 // pred_check_branch
        %207 = sbr.rel (%p204) target = $region12
      $region11: #{residual_block_forward.1} parent=5 // pred_region
        %s208 = ssub.s32 %s16, 1
        // Predicated region
        $region13: #{residual_block_forward.1} parent=11 // pred_check
          %p209 = pneg %p63
        $region14: #{residual_block_forward.1} parent=11 // pred_check_branch
          %211 = sbr.rel (%p209) target = $region16
        $region15: #{residual_block_forward.1} parent=11 // pred_region
          _
        $region16: #{residual_block_forward.1} parent=11 // pred_fallthru
          _
        // Predicated region
        $region17: #{residual_block_forward.1} parent=11 // pred_check
          %p212 = pneg %p84
        $region18: #{residual_block_forward.1} parent=11 // pred_check_branch
          %214 = sbr.rel (%p212) target = $region20
        $region19: #{residual_block_forward.1} parent=11 // pred_region
          _
        $region20: #{residual_block_forward.1} parent=11 // pred_fallthru
          _
        // Predicated region
        $region21: #{residual_block_forward.1} parent=11 // pred_check
          %p215 = pneg %p105
        $region22: #{residual_block_forward.1} parent=11 // pred_check_branch
          %217 = sbr.rel (%p215) target = $region24
        $region23: #{residual_block_forward.1} parent=11 // pred_region
          _
        $region24: #{residual_block_forward.1} parent=11 // pred_fallthru
          _
        // Predicated region
        $region25: #{residual_block_forward.1} parent=11 // pred_check
          %p218 = pneg %p126
        $region26: #{residual_block_forward.1} parent=11 // pred_check_branch
          %220 = sbr.rel (%p218) target = $region28
        $region27: #{residual_block_forward.1} parent=11 // pred_region
          _
        $region28: #{residual_block_forward.1} parent=11 // pred_fallthru
          _
        // Predicated region
        $region29: #{residual_block_forward.1} parent=11 // pred_check
          %p221 = pneg %p147
        $region30: #{residual_block_forward.1} parent=11 // pred_check_branch
          %223 = sbr.rel (%p221) target = $region32
        $region31: #{residual_block_forward.1} parent=11 // pred_region
          _
        $region32: #{residual_block_forward.1} parent=11 // pred_fallthru
          _
        // Predicated region
        $region33: #{residual_block_forward.1} parent=11 // pred_check
          %p224 = pneg %p168
        $region34: #{residual_block_forward.1} parent=11 // pred_check_branch
          %226 = sbr.rel (%p224) target = $region36
        $region35: #{residual_block_forward.1} parent=11 // pred_region
          _
        $region36: #{residual_block_forward.1} parent=11 // pred_fallthru
          _
      $region12: #{residual_block_forward.1} parent=5 // pred_fallthru
        _
      %p227 = scmp.lt.s32.totalorder %s16, 2
      // Predicated region
      $region37: #{residual_block_forward.1} parent=5 // pred_check
        %p228 = pneg %p227
      $region38: #{residual_block_forward.1} parent=5 // pred_check_branch
        %230 = sbr.rel (%p228) target = $region40
      $region39: #{residual_block_forward.1} parent=5 // pred_region
        // Predicated region
        $region41: #{residual_block_forward.1} parent=39 // pred_check
          %p231 = pneg %p36
        $region42: #{residual_block_forward.1} parent=39 // pred_check_branch
          %233 = sbr.rel (%p231) target = $region44
        $region43: #{residual_block_forward.1} parent=39 // pred_region
          %p234 = scmp.lt.s32.totalorder %s16, 1
          %s235 = scalar_select %p234, %s16, 1
          %s236 = smul.addr %s235, 13
          %s237 = smul.addr %s236, 4
          %s238 = scalar_lea.vmem %s0, %s237
        $region44: #{residual_block_forward.1} parent=39 // pred_fallthru
          _
      $region40: #{residual_block_forward.1} parent=5 // pred_fallthru
        _
      %p239 = scmp.le.s32.totalorder 1, %s16
      %p240 = scmp.lt.s32.totalorder %s16, 3
      %p241 = pnand %p239, %p240
      %p242 = pneg %p241
      // Predicated region
      $region45: #{residual_block_forward.1} parent=5 // pred_check
        _
      $region46: #{residual_block_forward.1} parent=5 // pred_check_branch
        %244 = sbr.rel (%p241) target = $region48
      $region47: #{residual_block_forward.1} parent=5 // pred_region
        %s245 = ssub.s32 %s16, 1
        %p246 = scmp.lt.s32.totalorder %s21, 1
        %s247 = scalar_select %p246, %s21, 1
        %s248 = smul.addr %s247, 13
        %s249 = smul.addr %s248, 4
        %s250 = scalar_lea.vmem %s0, %s249
        %p251 = pneg %p42
        %p252 = pneg %p39
        %p253 = pneg %p63
        %p254 = pneg %p60
        %p255 = pneg %p84
        %p256 = pneg %p81
        %p257 = pneg %p105
        %p258 = pneg %p102
        %p259 = pneg %p126
        %p260 = pneg %p123
        %p261 = pneg %p147
        %p262 = pneg %p144
        %p263 = pneg %p168
        %p264 = pneg %p165
        %p265 = pneg %p194
        %p266 = pneg %p191
        %s267 = sand.u32 %s181, 1
        %s268 = scalar_lea.sflag [#allocation5], %s267
        %s269 = sand.u32 %s181, 1
        %s270 = smul.addr %s269, 32
        %s271 = scalar_lea.vmem [#allocation4], %s270
        %p272 = scmp.lt.s32.totalorder %s21, 1
        %s273 = scalar_select %p272, %s21, 1
        %s274 = smul.addr %s273, 13
        %s275 = smul.addr %s274, 4
        %s276 = scalar_lea.vmem %s0, %s275
        %v278 = vld [vmem:[%s276] sm:$0xf]
        %v279 = vld [vmem:[%s276 + $0x4] sm:$0xf]
        %v280 = vld [vmem:[%s276 + $0x8] sm:$0xf]
        %v281 = vld [vmem:[%s276 + $0xc] sm:$0xf]
        %v282 = vld [vmem:[%s276 + $0x10] sm:$0xf]
        %v283 = vld [vmem:[%s276 + $0x14] sm:$0xf]
        %v284 = vld [vmem:[%s276 + $0x18] sm:$0xf]
        %v285 = vld [vmem:[%s276 + $0x1c] sm:$0xf]
        %v286 = vld [vmem:[%s276 + $0x20] sm:$0xf]
        %v287 = vld [vmem:[%s276 + $0x24] sm:$0xf]
        %v288 = vld [vmem:[%s276 + $0x28] sm:$0xf]
        %v289 = vld [vmem:[%s276 + $0x2c] sm:$0xf]
        %v290 = vld [vmem:[%s276 + $0x30] sm:$0x1]
        %v291 = vld [vmem:[%s1] sm:$0xf]
        %v292 = vld [vmem:[%s1 + $0x4] sm:$0xf]
        %v293 = vld [vmem:[%s1 + $0x8] sm:$0xf]
        %v294 = vld [vmem:[%s1 + $0xc] sm:$0xf]
        %s295 = scalar_lea.vmem %s1, 16
        %v296 = vld [vmem:[%s295] sm:$0xf]
        %v297 = vld [vmem:[%s295 + $0x4] sm:$0xf]
        %v298 = vld [vmem:[%s295 + $0x8] sm:$0xf]
        %v299 = vld [vmem:[%s295 + $0xc] sm:$0xf]
        %v313 = vunpack.c.l.b16 %v278
        %v314 = vunpack.c.l.b16 %v279
        %v315 = vunpack.c.l.b16 %v280
        %v316 = vunpack.c.l.b16 %v281
        %v317 = vunpack.c.l.b16 %v282
        %v318 = vunpack.c.l.b16 %v283
        %v319 = vunpack.c.l.b16 %v284
        %v320 = vunpack.c.l.b16 %v285
        %v321 = vunpack.c.l.b16 %v286
        %v322 = vunpack.c.l.b16 %v287
        %v323 = vunpack.c.l.b16 %v288
        %v324 = vunpack.c.l.b16 %v289
        %v325 = vunpack.c.l.b16 %v290
        %v326 = vpack.c.b16 %v314, %v313
        %v327 = vpack.c.b16 %v316, %v315
        %v328 = vpack.c.b16 %v318, %v317
        %v329 = vpack.c.b16 %v320, %v319
        %v330 = vpack.c.b16 %v322, %v321
        %v331 = vpack.c.b16 %v324, %v323
        %v332 = vpack.c.b16 %v325, %v325
        %vm333 = vsmask.f32 7424
        %v335 = vshrl.u32 %v326, 16
        %v337 = vshll.u32 %v326, 16
        %v339 = vrot.slane %v337, 1
        %v340 = vor.u32 %v335, %v339
        %v342 = vshll.u32 %v327, 16
        %v344 = vrot.slane %v342, 1
        %v345 = vsel %vm333, %v340, %v344
        %v346 = vshrl.u32 %v327, 16
        %v348 = vor.u32 %v346, %v344
        %v350 = vshll.u32 %v328, 16
        %v352 = vrot.slane %v350, 1
        %v353 = vsel %vm333, %v348, %v352
        %v354 = vshrl.u32 %v328, 16
        %v356 = vor.u32 %v354, %v352
        %v358 = vshll.u32 %v329, 16
        %v360 = vrot.slane %v358, 1
        %v361 = vsel %vm333, %v356, %v360
        %v362 = vshrl.u32 %v329, 16
        %v364 = vor.u32 %v362, %v360
        %v366 = vshll.u32 %v330, 16
        %v368 = vrot.slane %v366, 1
        %v369 = vsel %vm333, %v364, %v368
        %v370 = vshrl.u32 %v330, 16
        %v372 = vor.u32 %v370, %v368
        %v374 = vshll.u32 %v331, 16
        %v376 = vrot.slane %v374, 1
        %v377 = vsel %vm333, %v372, %v376
        %v378 = vshrl.u32 %v331, 16
        %v380 = vor.u32 %v378, %v376
        %v382 = vshll.u32 %v332, 16
        %v384 = vrot.slane %v382, 1
        %v385 = vsel %vm333, %v380, %v384
        %v390 = vunpack.c.l.b16 %v296
        %v391 = vunpack.c.l.b16 %v297
        %v392 = vunpack.c.l.b16 %v298
        %v393 = vunpack.c.l.b16 %v299
        %v394 = vpack.c.b16 %v391, %v390
        %v395 = vpack.c.b16 %v393, %v392
        %vm398 = vcmask 261120
        %v400 = vsel %vm398, %v345, 0
        %v403 = vsel %vm398, %v353, 0
        %v406 = vsel %vm398, %v361, 0
        %v409 = vsel %vm398, %v369, 0
        %v412 = vsel %vm398, %v377, 0
        %v415 = vsel %vm398, %v385, 0
        %417 = vmatprep.subr.bf16.mxu0 0
        %418 = vmatpush1.bf16.msra.mxu0 %v394
        %419 = vmatprep.subr.bf16.mxu0 0
        %420 = vmatpush1.bf16.msra.mxu0 %v395
        %421 = vmatprep.subr.bf16.mxu0 0
        %422 = vmatpush1.bf16.msra.mxu0 0
        %423 = vmatprep.subr.bf16.mxu0 0
        %424 = vmatpush1.bf16.msra.mxu0 0
        %425 = vmatprep.subr.bf16.mxu0 0
        %426 = vmatpush1.bf16.msra.mxu0 0
        %427 = vmatprep.subr.bf16.mxu0 0
        %428 = vmatpush1.bf16.msra.mxu0 0
        %429 = vmatprep.subr.bf16.mxu0 0
        %430 = vmatpush1.bf16.msra.mxu0 0
        %431 = vmatprep.subr.bf16.mxu0 0
        %432 = vmatpush1.bf16.msra.mxu0 0
        %433 = vmatprep.subr.bf16.mxu0 0
        %434 = vmatpush1.bf16.msra.mxu0 0
        %435 = vmatprep.subr.bf16.mxu0 0
        %436 = vmatpush1.bf16.msra.mxu0 0
        %437 = vmatprep.subr.bf16.mxu0 0
        %438 = vmatpush1.bf16.msra.mxu0 0
        %439 = vmatprep.subr.bf16.mxu0 0
        %440 = vmatpush1.bf16.msra.mxu0 0
        %441 = vmatprep.subr.bf16.mxu0 0
        %442 = vmatpush1.bf16.msra.mxu0 0
        %443 = vmatprep.subr.bf16.mxu0 0
        %444 = vmatpush1.bf16.msra.mxu0 0
        %445 = vmatprep.subr.bf16.mxu0 0
        %446 = vmatpush1.bf16.msra.mxu0 0
        %447 = vmatprep.subr.bf16.mxu0 0
        %448 = vmatpush1.bf16.msra.mxu0 0
        %449 = vmatprep.mubr.bf16.mxu0 0
        %450 = vmatmul.mubr.bf16.gmra.mrb[0].mxu0 %v400
        %v451 = vpop.f32.mrb[0].mxu0
        %v452 = vadd.f32 0.0, %v451
        %v453 = vpop.f32.mrb[0].mxu0
        %v454 = vpop.f32.mrb[0].mxu0
        %v455 = vadd.f32 0.0, %v454
        %v456 = vpop.f32.mrb[0].mxu0
        %457 = vmatprep.mubr.bf16.mxu0 0
        %458 = vmatmul.mubr.bf16.gmra.mrb[0].mxu0 %v403
        %v459 = vpop.f32.mrb[0].mxu0
        %v460 = vadd.f32 0.0, %v459
        %v461 = vpop.f32.mrb[0].mxu0
        %v462 = vpop.f32.mrb[0].mxu0
        %v463 = vadd.f32 0.0, %v462
        %v464 = vpop.f32.mrb[0].mxu0
        %465 = vmatprep.mubr.bf16.mxu0 0
        %466 = vmatmul.mubr.bf16.gmra.mrb[0].mxu0 %v406
        %v467 = vpop.f32.mrb[0].mxu0
        %v468 = vadd.f32 0.0, %v467
        %v469 = vpop.f32.mrb[0].mxu0
        %v470 = vpop.f32.mrb[0].mxu0
        %v471 = vadd.f32 0.0, %v470
        %v472 = vpop.f32.mrb[0].mxu0
        %473 = vmatprep.mubr.bf16.mxu0 0
        %474 = vmatmul.mubr.bf16.gmra.mrb[0].mxu0 %v409
        %v475 = vpop.f32.mrb[0].mxu0
        %v476 = vadd.f32 0.0, %v475
        %v477 = vpop.f32.mrb[0].mxu0
        %v478 = vpop.f32.mrb[0].mxu0
        %v479 = vadd.f32 0.0, %v478
        %v480 = vpop.f32.mrb[0].mxu0
        %481 = vmatprep.mubr.bf16.mxu0 0
        %482 = vmatmul.mubr.bf16.gmra.mrb[0].mxu0 %v412
        %v483 = vpop.f32.mrb[0].mxu0
        %v484 = vadd.f32 0.0, %v483
        %v485 = vpop.f32.mrb[0].mxu0
        %v486 = vpop.f32.mrb[0].mxu0
        %v487 = vadd.f32 0.0, %v486
        %v488 = vpop.f32.mrb[0].mxu0
        %489 = vmatprep.mubr.bf16.mxu0 0
        %490 = vmatmul.mubr.bf16.gmra.mrb[0].mxu0 %v415
        %v491 = vpop.f32.mrb[0].mxu0
        %v492 = vadd.f32 0.0, %v491
        %v493 = vpop.f32.mrb[0].mxu0
        %v494 = vpop.f32.mrb[0].mxu0
        %v495 = vadd.f32 0.0, %v494
        %v496 = vpop.f32.mrb[0].mxu0
        %497 = vdwg.mxu0
        %v502 = vunpack.c.l.b16 %v291
        %v503 = vunpack.c.l.b16 %v292
        %v504 = vunpack.c.l.b16 %v293
        %v505 = vunpack.c.l.b16 %v294
        %v506 = vpack.c.b16 %v503, %v502
        %v507 = vpack.c.b16 %v505, %v504
        %v510 = vsel %vm398, %v326, 0
        %v512 = vsel %vm398, %v327, 0
        %v514 = vsel %vm398, %v328, 0
        %v516 = vsel %vm398, %v329, 0
        %v518 = vsel %vm398, %v330, 0
        %v520 = vsel %vm398, %v331, 0
        %522 = vmatprep.subr.bf16.mxu0 0
        %523 = vmatpush1.bf16.msra.mxu0 %v506
        %524 = vmatprep.subr.bf16.mxu0 0
        %525 = vmatpush1.bf16.msra.mxu0 %v507
        %526 = vmatprep.subr.bf16.mxu0 0
        %527 = vmatpush1.bf16.msra.mxu0 0
        %528 = vmatprep.subr.bf16.mxu0 0
        %529 = vmatpush1.bf16.msra.mxu0 0
        %530 = vmatprep.subr.bf16.mxu0 0
        %531 = vmatpush1.bf16.msra.mxu0 0
        %532 = vmatprep.subr.bf16.mxu0 0
        %533 = vmatpush1.bf16.msra.mxu0 0
        %534 = vmatprep.subr.bf16.mxu0 0
        %535 = vmatpush1.bf16.msra.mxu0 0
        %536 = vmatprep.subr.bf16.mxu0 0
        %537 = vmatpush1.bf16.msra.mxu0 0
        %538 = vmatprep.subr.bf16.mxu0 0
        %539 = vmatpush1.bf16.msra.mxu0 0
        %540 = vmatprep.subr.bf16.mxu0 0
        %541 = vmatpush1.bf16.msra.mxu0 0
        %542 = vmatprep.subr.bf16.mxu0 0
        %543 = vmatpush1.bf16.msra.mxu0 0
        %544 = vmatprep.subr.bf16.mxu0 0
        %545 = vmatpush1.bf16.msra.mxu0 0
        %546 = vmatprep.subr.bf16.mxu0 0
        %547 = vmatpush1.bf16.msra.mxu0 0
        %548 = vmatprep.subr.bf16.mxu0 0
        %549 = vmatpush1.bf16.msra.mxu0 0
        %550 = vmatprep.subr.bf16.mxu0 0
        %551 = vmatpush1.bf16.msra.mxu0 0
        %552 = vmatprep.subr.bf16.mxu0 0
        %553 = vmatpush1.bf16.msra.mxu0 0
        %554 = vmatprep.mubr.bf16.mxu0 0
        %555 = vmatmul.mubr.bf16.gmra.mrb[0].mxu0 %v510
        %v556 = vpop.f32.mrb[0].mxu0
        %v557 = vadd.f32 %v452, %v556
        %v558 = vpop.f32.mrb[0].mxu0
        %v559 = vpop.f32.mrb[0].mxu0
        %v560 = vadd.f32 %v455, %v559
        %v561 = vpop.f32.mrb[0].mxu0
        %562 = vmatprep.mubr.bf16.mxu0 0
        %563 = vmatmul.mubr.bf16.gmra.mrb[0].mxu0 %v512
        %v564 = vpop.f32.mrb[0].mxu0
        %v565 = vadd.f32 %v460, %v564
        %v566 = vpop.f32.mrb[0].mxu0
        %v567 = vpop.f32.mrb[0].mxu0
        %v568 = vadd.f32 %v463, %v567
        %v569 = vpop.f32.mrb[0].mxu0
        %570 = vmatprep.mubr.bf16.mxu0 0
        %571 = vmatmul.mubr.bf16.gmra.mrb[0].mxu0 %v514
        %v572 = vpop.f32.mrb[0].mxu0
        %v573 = vadd.f32 %v468, %v572
        %v574 = vpop.f32.mrb[0].mxu0
        %v575 = vpop.f32.mrb[0].mxu0
        %v576 = vadd.f32 %v471, %v575
        %v577 = vpop.f32.mrb[0].mxu0
        %578 = vmatprep.mubr.bf16.mxu0 0
        %579 = vmatmul.mubr.bf16.gmra.mrb[0].mxu0 %v516
        %v580 = vpop.f32.mrb[0].mxu0
        %v581 = vadd.f32 %v476, %v580
        %v582 = vpop.f32.mrb[0].mxu0
        %v583 = vpop.f32.mrb[0].mxu0
        %v584 = vadd.f32 %v479, %v583
        %v585 = vpop.f32.mrb[0].mxu0
        %586 = vmatprep.mubr.bf16.mxu0 0
        %587 = vmatmul.mubr.bf16.gmra.mrb[0].mxu0 %v518
        %v588 = vpop.f32.mrb[0].mxu0
        %v589 = vadd.f32 %v484, %v588
        %v590 = vpop.f32.mrb[0].mxu0
        %v591 = vpop.f32.mrb[0].mxu0
        %v592 = vadd.f32 %v487, %v591
        %v593 = vpop.f32.mrb[0].mxu0
        %594 = vmatprep.mubr.bf16.mxu0 0
        %595 = vmatmul.mubr.bf16.gmra.mrb[0].mxu0 %v520
        %v596 = vpop.f32.mrb[0].mxu0
        %v597 = vadd.f32 %v492, %v596
        %v598 = vpop.f32.mrb[0].mxu0
        %v599 = vpop.f32.mrb[0].mxu0
        %v600 = vadd.f32 %v495, %v599
        %v601 = vpop.f32.mrb[0].mxu0
        %602 = vdwg.mxu0
        %s603 = scalar_lea.vmem %s1, 32
        %v604 = vld [vmem:[%s603] sm:$0xf]
        %v605 = vld [vmem:[%s603 + $0x4] sm:$0xf]
        %v606 = vld [vmem:[%s603 + $0x8] sm:$0xf]
        %v607 = vld [vmem:[%s603 + $0xc] sm:$0xf]
        %vm608 = vcmask 1046528
        %v609 = vrot.slane %v326, 1
        %v610 = vrot.slane %v327, 1
        %v611 = vsel %vm608, %v609, %v610
        %v612 = vrot.slane %v328, 1
        %v613 = vsel %vm608, %v610, %v612
        %v614 = vrot.slane %v329, 1
        %v615 = vsel %vm608, %v612, %v614
        %v616 = vrot.slane %v330, 1
        %v617 = vsel %vm608, %v614, %v616
        %v618 = vrot.slane %v331, 1
        %v619 = vsel %vm608, %v616, %v618
        %v620 = vrot.slane %v332, 1
        %v621 = vsel %vm608, %v618, %v620
        %v626 = vunpack.c.l.b16 %v604
        %v627 = vunpack.c.l.b16 %v605
        %v628 = vunpack.c.l.b16 %v606
        %v629 = vunpack.c.l.b16 %v607
        %v630 = vpack.c.b16 %v627, %v626
        %v631 = vpack.c.b16 %v629, %v628
        %v635 = vsel %vm398, %v611, 0
        %v638 = vsel %vm398, %v613, 0
        %v641 = vsel %vm398, %v615, 0
        %v644 = vsel %vm398, %v617, 0
        %v647 = vsel %vm398, %v619, 0
        %v650 = vsel %vm398, %v621, 0
        %652 = vmatprep.subr.bf16.mxu0 0
        %653 = vmatpush1.bf16.msra.mxu0 %v630
        %654 = vmatprep.subr.bf16.mxu0 0
        %655 = vmatpush1.bf16.msra.mxu0 %v631
        %656 = vmatprep.subr.bf16.mxu0 0
        %657 = vmatpush1.bf16.msra.mxu0 0
        %658 = vmatprep.subr.bf16.mxu0 0
        %659 = vmatpush1.bf16.msra.mxu0 0
        %660 = vmatprep.subr.bf16.mxu0 0
        %661 = vmatpush1.bf16.msra.mxu0 0
        %662 = vmatprep.subr.bf16.mxu0 0
        %663 = vmatpush1.bf16.msra.mxu0 0
        %664 = vmatprep.subr.bf16.mxu0 0
        %665 = vmatpush1.bf16.msra.mxu0 0
        %666 = vmatprep.subr.bf16.mxu0 0
        %667 = vmatpush1.bf16.msra.mxu0 0
        %668 = vmatprep.subr.bf16.mxu0 0
        %669 = vmatpush1.bf16.msra.mxu0 0
        %670 = vmatprep.subr.bf16.mxu0 0
        %671 = vmatpush1.bf16.msra.mxu0 0
        %672 = vmatprep.subr.bf16.mxu0 0
        %673 = vmatpush1.bf16.msra.mxu0 0
        %674 = vmatprep.subr.bf16.mxu0 0
        %675 = vmatpush1.bf16.msra.mxu0 0
        %676 = vmatprep.subr.bf16.mxu0 0
        %677 = vmatpush1.bf16.msra.mxu0 0
        %678 = vmatprep.subr.bf16.mxu0 0
        %679 = vmatpush1.bf16.msra.mxu0 0
        %680 = vmatprep.subr.bf16.mxu0 0
        %681 = vmatpush1.bf16.msra.mxu0 0
        %682 = vmatprep.subr.bf16.mxu0 0
        %683 = vmatpush1.bf16.msra.mxu0 0
        %684 = vmatprep.mubr.bf16.mxu0 0
        %685 = vmatmul.mubr.bf16.gmra.mrb[0].mxu0 %v635
        %v686 = vpop.f32.mrb[0].mxu0
        %v687 = vadd.f32 0.0, %v686
        %v688 = vpop.f32.mrb[0].mxu0
        %v689 = vpop.f32.mrb[0].mxu0
        %v690 = vadd.f32 0.0, %v689
        %v691 = vpop.f32.mrb[0].mxu0
        %692 = vmatprep.mubr.bf16.mxu0 0
        %693 = vmatmul.mubr.bf16.gmra.mrb[0].mxu0 %v638
        %v694 = vpop.f32.mrb[0].mxu0
        %v695 = vadd.f32 0.0, %v694
        %v696 = vpop.f32.mrb[0].mxu0
        %v697 = vpop.f32.mrb[0].mxu0
        %v698 = vadd.f32 0.0, %v697
        %v699 = vpop.f32.mrb[0].mxu0
        %700 = vmatprep.mubr.bf16.mxu0 0
        %701 = vmatmul.mubr.bf16.gmra.mrb[0].mxu0 %v641
        %v702 = vpop.f32.mrb[0].mxu0
        %v703 = vadd.f32 0.0, %v702
        %v704 = vpop.f32.mrb[0].mxu0
        %v705 = vpop.f32.mrb[0].mxu0
        %v706 = vadd.f32 0.0, %v705
        %v707 = vpop.f32.mrb[0].mxu0
        %708 = vmatprep.mubr.bf16.mxu0 0
        %709 = vmatmul.mubr.bf16.gmra.mrb[0].mxu0 %v644
        %v710 = vpop.f32.mrb[0].mxu0
        %v711 = vadd.f32 0.0, %v710
        %v712 = vpop.f32.mrb[0].mxu0
        %v713 = vpop.f32.mrb[0].mxu0
        %v714 = vadd.f32 0.0, %v713
        %v715 = vpop.f32.mrb[0].mxu0
        %716 = vmatprep.mubr.bf16.mxu0 0
        %717 = vmatmul.mubr.bf16.gmra.mrb[0].mxu0 %v647
        %v718 = vpop.f32.mrb[0].mxu0
        %v719 = vadd.f32 0.0, %v718
        %v720 = vpop.f32.mrb[0].mxu0
        %v721 = vpop.f32.mrb[0].mxu0
        %v722 = vadd.f32 0.0, %v721
        %v723 = vpop.f32.mrb[0].mxu0
        %724 = vmatprep.mubr.bf16.mxu0 0
        %725 = vmatmul.mubr.bf16.gmra.mrb[0].mxu0 %v650
        %v726 = vpop.f32.mrb[0].mxu0
        %v727 = vadd.f32 0.0, %v726
        %v728 = vpop.f32.mrb[0].mxu0
        %v729 = vpop.f32.mrb[0].mxu0
        %v730 = vadd.f32 0.0, %v729
        %v731 = vpop.f32.mrb[0].mxu0
        %732 = vdwg.mxu0
        %v733 = vadd.f32 %v557, %v687
        %v734 = vadd.f32 %v560, %v690
        %v735 = vadd.f32 %v565, %v695
        %v736 = vadd.f32 %v568, %v698
        %v737 = vadd.f32 %v573, %v703
        %v738 = vadd.f32 %v576, %v706
        %v739 = vadd.f32 %v581, %v711
        %v740 = vadd.f32 %v584, %v714
        %v741 = vadd.f32 %v589, %v719
        %v742 = vadd.f32 %v592, %v722
        %v743 = vadd.f32 %v597, %v727
        %v744 = vadd.f32 %v600, %v730
        %v745 = vld [vmem:[%s2] sm:$0x1]
        %v747 = vlaneseq
        %v748 = vshrl.u32 %v747, 7
        %v749 = vsub.s32 0, %v748
        %v750 = vrot.slane %v745, %v749
        %v752 = vadd.f32 %v733, %v750
        %v753 = vadd.f32 %v734, %v750
        %v754 = vadd.f32 %v735, %v750
        %v755 = vadd.f32 %v736, %v750
        %v756 = vadd.f32 %v737, %v750
        %v757 = vadd.f32 %v738, %v750
        %v758 = vadd.f32 %v739, %v750
        %v759 = vadd.f32 %v740, %v750
        %v760 = vadd.f32 %v741, %v750
        %v761 = vadd.f32 %v742, %v750
        %v762 = vadd.f32 %v743, %v750
        %v763 = vadd.f32 %v744, %v750
        %vm764 = vcmp.gt.f32.partialorder %v752, 0.0
        %vm765 = vcmp.gt.f32.partialorder %v753, 0.0
        %vm766 = vcmp.gt.f32.partialorder %v754, 0.0
        %vm767 = vcmp.gt.f32.partialorder %v755, 0.0
        %vm768 = vcmp.gt.f32.partialorder %v756, 0.0
        %vm769 = vcmp.gt.f32.partialorder %v757, 0.0
        %vm770 = vcmp.gt.f32.partialorder %v758, 0.0
        %vm771 = vcmp.gt.f32.partialorder %v759, 0.0
        %vm772 = vcmp.gt.f32.partialorder %v760, 0.0
        %vm773 = vcmp.gt.f32.partialorder %v761, 0.0
        %vm774 = vcmp.gt.f32.partialorder %v762, 0.0
        %vm775 = vcmp.gt.f32.partialorder %v763, 0.0
        %v776 = vmul.f32 %v752, 0.3
        %v777 = vmul.f32 %v753, 0.3
        %v778 = vmul.f32 %v754, 0.3
        %v779 = vmul.f32 %v755, 0.3
        %v780 = vmul.f32 %v756, 0.3
        %v781 = vmul.f32 %v757, 0.3
        %v782 = vmul.f32 %v758, 0.3
        %v783 = vmul.f32 %v759, 0.3
        %v784 = vmul.f32 %v760, 0.3
        %v785 = vmul.f32 %v761, 0.3
        %v786 = vmul.f32 %v762, 0.3
        %v787 = vmul.f32 %v763, 0.3
        %v788 = vsel %vm764, %v752, %v776
        %v789 = vsel %vm765, %v753, %v777
        %v790 = vsel %vm766, %v754, %v778
        %v791 = vsel %vm767, %v755, %v779
        %v792 = vsel %vm768, %v756, %v780
        %v793 = vsel %vm769, %v757, %v781
        %v794 = vsel %vm770, %v758, %v782
        %v795 = vsel %vm771, %v759, %v783
        %v796 = vsel %vm772, %v760, %v784
        %v797 = vsel %vm773, %v761, %v785
        %v798 = vsel %vm774, %v762, %v786
        %v799 = vsel %vm775, %v763, %v787
        %vm800 = vcmask 516096
        %vm801 = vsmask.f32 256
        %vm802 = vmand %vm800, %vm801
        %v803 = vld [vmem:[#allocation2] sm:$0x1]
        %v804 = vsel %vm802, 0, %v803
        %805 = vst [vmem:[#allocation2] sm:$0x1] %v804
        %vm806 = vsmask.f32 7938
        %vm807 = vmand %vm800, %vm806
        %v808 = vld [vmem:[#allocation2 + $0x30] sm:$0x1]
        %v809 = vsel %vm807, 0, %v808
        %810 = vst [vmem:[#allocation2 + $0x30] sm:$0x1] %v809
        %v811 = vpack.c.bf16 %v789, %v788
        %v812 = vpack.c.bf16 %v791, %v790
        %v813 = vpack.c.bf16 %v793, %v792
        %v814 = vpack.c.bf16 %v795, %v794
        %v815 = vpack.c.bf16 %v797, %v796
        %v816 = vpack.c.bf16 %v799, %v798
        %v823 = vunpack.c.l.b16 %v811
        %v824 = vunpack.c.h.b16 %v811
        %v825 = vunpack.c.l.b16 %v812
        %v826 = vunpack.c.h.b16 %v812
        %v827 = vunpack.c.l.b16 %v813
        %v828 = vunpack.c.h.b16 %v813
        %v829 = vunpack.c.l.b16 %v814
        %v830 = vunpack.c.h.b16 %v814
        %v831 = vunpack.c.l.b16 %v815
        %v832 = vunpack.c.h.b16 %v815
        %v833 = vunpack.c.l.b16 %v816
        %v834 = vunpack.c.h.b16 %v816
        %v835 = vpack.c.b16 %v823, %v823
        %v836 = vpack.c.b16 %v824, %v824
        %v837 = vpack.c.b16 %v825, %v825
        %v838 = vpack.c.b16 %v826, %v826
        %v839 = vpack.c.b16 %v827, %v827
        %v840 = vpack.c.b16 %v828, %v828
        %v841 = vpack.c.b16 %v829, %v829
        %v842 = vpack.c.b16 %v830, %v830
        %v843 = vpack.c.b16 %v831, %v831
        %v844 = vpack.c.b16 %v832, %v832
        %v845 = vpack.c.b16 %v833, %v833
        %v846 = vpack.c.b16 %v834, %v834
        %vm847 = vsmask.f32 4368
        %vm848 = vmor %vm801, %vm847
        %v850 = vshrl.u32 %v835, 16
        %v852 = vrot.slane %v850, 7
        %v853 = vshll.u32 %v835, 16
        %v855 = vor.u32 %v852, %v853
        %v856 = vrot.slane %v852, 4
        %v858 = vshrl.u32 %v836, 16
        %v860 = vrot.slane %v858, 7
        %v861 = vshll.u32 %v836, 16
        %v863 = vor.u32 %v860, %v861
        %v864 = vsel %vm848, %v856, %v863
        %v865 = vrot.slane %v860, 4
        %v867 = vshrl.u32 %v837, 16
        %v869 = vrot.slane %v867, 7
        %v870 = vshll.u32 %v837, 16
        %v872 = vor.u32 %v869, %v870
        %v873 = vsel %vm848, %v865, %v872
        %v874 = vrot.slane %v869, 4
        %v876 = vshrl.u32 %v838, 16
        %v878 = vrot.slane %v876, 7
        %v879 = vshll.u32 %v838, 16
        %v881 = vor.u32 %v878, %v879
        %v882 = vsel %vm848, %v874, %v881
        %v883 = vrot.slane %v878, 4
        %v885 = vshrl.u32 %v839, 16
        %v887 = vrot.slane %v885, 7
        %v888 = vshll.u32 %v839, 16
        %v890 = vor.u32 %v887, %v888
        %v891 = vsel %vm848, %v883, %v890
        %v892 = vrot.slane %v887, 4
        %v894 = vshrl.u32 %v840, 16
        %v896 = vrot.slane %v894, 7
        %v897 = vshll.u32 %v840, 16
        %v899 = vor.u32 %v896, %v897
        %v900 = vsel %vm848, %v892, %v899
        %v901 = vrot.slane %v896, 4
        %v903 = vshrl.u32 %v841, 16
        %v905 = vrot.slane %v903, 7
        %v906 = vshll.u32 %v841, 16
        %v908 = vor.u32 %v905, %v906
        %v909 = vsel %vm848, %v901, %v908
        %v910 = vrot.slane %v905, 4
        %v912 = vshrl.u32 %v842, 16
        %v914 = vrot.slane %v912, 7
        %v915 = vshll.u32 %v842, 16
        %v917 = vor.u32 %v914, %v915
        %v918 = vsel %vm848, %v910, %v917
        %v919 = vrot.slane %v914, 4
        %v921 = vshrl.u32 %v843, 16
        %v923 = vrot.slane %v921, 7
        %v924 = vshll.u32 %v843, 16
        %v926 = vor.u32 %v923, %v924
        %v927 = vsel %vm848, %v919, %v926
        %v928 = vrot.slane %v923, 4
        %v930 = vshrl.u32 %v844, 16
        %v932 = vrot.slane %v930, 7
        %v933 = vshll.u32 %v844, 16
        %v935 = vor.u32 %v932, %v933
        %v936 = vsel %vm848, %v928, %v935
        %v937 = vrot.slane %v932, 4
        %v939 = vshrl.u32 %v845, 16
        %v941 = vrot.slane %v939, 7
        %v942 = vshll.u32 %v845, 16
        %v944 = vor.u32 %v941, %v942
        %v945 = vsel %vm848, %v937, %v944
        %v946 = vrot.slane %v941, 4
        %v948 = vshrl.u32 %v846, 16
        %v950 = vrot.slane %v948, 7
        %v951 = vshll.u32 %v846, 16
        %v953 = vor.u32 %v950, %v951
        %v954 = vsel %vm848, %v946, %v953
        %v955 = vrot.slane %v950, 4
        %vm969 = vcmask 519168
        %vm970 = vmand %vm969, %vm806
        %v971 = vld [vmem:[#allocation2] sm:$0xf]
        %v972 = vsel %vm970, %v855, %v971
        %973 = vst [vmem:[#allocation2] sm:$0xf] %v972
        %vm974 = vcmask 519168
        %975 = vst.msk [vmem:[#allocation2 + $0x4] sm:$0xf] %vm974, %v864
        %976 = vst.msk [vmem:[#allocation2 + $0x8] sm:$0xf] %vm974, %v873
        %977 = vst.msk [vmem:[#allocation2 + $0xc] sm:$0xf] %vm974, %v882
        %978 = vst.msk [vmem:[#allocation2 + $0x10] sm:$0xf] %vm974, %v891
        %979 = vst.msk [vmem:[#allocation2 + $0x14] sm:$0xf] %vm974, %v900
        %980 = vst.msk [vmem:[#allocation2 + $0x18] sm:$0xf] %vm974, %v909
        %981 = vst.msk [vmem:[#allocation2 + $0x1c] sm:$0xf] %vm974, %v918
        %982 = vst.msk [vmem:[#allocation2 + $0x20] sm:$0xf] %vm974, %v927
        %983 = vst.msk [vmem:[#allocation2 + $0x24] sm:$0xf] %vm974, %v936
        %984 = vst.msk [vmem:[#allocation2 + $0x28] sm:$0xf] %vm974, %v945
        %985 = vst.msk [vmem:[#allocation2 + $0x2c] sm:$0xf] %vm974, %v954
        %v986 = vld [vmem:[#allocation2 + $0x30] sm:$0x1]
        %v987 = vsel %vm802, %v955, %v986
        %988 = vst [vmem:[#allocation2 + $0x30] sm:$0x1] %v987
        %v989 = vld [vmem:[#allocation2] sm:$0xf]
        %v990 = vld [vmem:[#allocation2 + $0x4] sm:$0xf]
        %v991 = vld [vmem:[#allocation2 + $0x8] sm:$0xf]
        %v992 = vld [vmem:[#allocation2 + $0xc] sm:$0xf]
        %v993 = vld [vmem:[#allocation2 + $0x10] sm:$0xf]
        %v994 = vld [vmem:[#allocation2 + $0x14] sm:$0xf]
        %v995 = vld [vmem:[#allocation2 + $0x18] sm:$0xf]
        %v996 = vld [vmem:[#allocation2 + $0x1c] sm:$0xf]
        %v997 = vld [vmem:[#allocation2 + $0x20] sm:$0xf]
        %v998 = vld [vmem:[#allocation2 + $0x24] sm:$0xf]
        %v999 = vld [vmem:[#allocation2 + $0x28] sm:$0xf]
        %v1000 = vld [vmem:[#allocation2 + $0x2c] sm:$0xf]
        %v1001 = vld [vmem:[#allocation2 + $0x30] sm:$0x1]
        %v1002 = vld [vmem:[%s3] sm:$0xf]
        %v1003 = vld [vmem:[%s3 + $0x4] sm:$0xf]
        %v1004 = vld [vmem:[%s3 + $0x8] sm:$0xf]
        %v1005 = vld [vmem:[%s3 + $0xc] sm:$0xf]
        %v1006 = vld [vmem:[%s3 + $0x10] sm:$0xf]
        %v1007 = vld [vmem:[%s3 + $0x14] sm:$0xf]
        %v1008 = vld [vmem:[%s3 + $0x18] sm:$0xf]
        %v1009 = vld [vmem:[%s3 + $0x1c] sm:$0xf]
        %s1010 = scalar_lea.vmem %s3, 32
        %v1011 = vld [vmem:[%s1010] sm:$0xf]
        %v1012 = vld [vmem:[%s1010 + $0x4] sm:$0xf]
        %v1013 = vld [vmem:[%s1010 + $0x8] sm:$0xf]
        %v1014 = vld [vmem:[%s1010 + $0xc] sm:$0xf]
        %v1015 = vld [vmem:[%s1010 + $0x10] sm:$0xf]
        %v1016 = vld [vmem:[%s1010 + $0x14] sm:$0xf]
        %v1017 = vld [vmem:[%s1010 + $0x18] sm:$0xf]
        %v1018 = vld [vmem:[%s1010 + $0x1c] sm:$0xf]
        %v1032 = vunpack.c.l.b16 %v989
        %v1033 = vunpack.c.l.b16 %v990
        %v1034 = vunpack.c.l.b16 %v991
        %v1035 = vunpack.c.l.b16 %v992
        %v1036 = vunpack.c.l.b16 %v993
        %v1037 = vunpack.c.l.b16 %v994
        %v1038 = vunpack.c.l.b16 %v995
        %v1039 = vunpack.c.l.b16 %v996
        %v1040 = vunpack.c.l.b16 %v997
        %v1041 = vunpack.c.l.b16 %v998
        %v1042 = vunpack.c.l.b16 %v999
        %v1043 = vunpack.c.l.b16 %v1000
        %v1044 = vunpack.c.l.b16 %v1001
        %v1045 = vpack.c.b16 %v1033, %v1032
        %v1046 = vpack.c.b16 %v1035, %v1034
        %v1047 = vpack.c.b16 %v1037, %v1036
        %v1048 = vpack.c.b16 %v1039, %v1038
        %v1049 = vpack.c.b16 %v1041, %v1040
        %v1050 = vpack.c.b16 %v1043, %v1042
        %v1051 = vpack.c.b16 %v1044, %v1044
        %v1053 = vshrl.u32 %v1045, 16
        %v1055 = vshll.u32 %v1045, 16
        %v1057 = vrot.slane %v1055, 1
        %v1058 = vor.u32 %v1053, %v1057
        %v1060 = vshll.u32 %v1046, 16
        %v1062 = vrot.slane %v1060, 1
        %v1063 = vsel %vm333, %v1058, %v1062
        %v1064 = vshrl.u32 %v1046, 16
        %v1066 = vor.u32 %v1064, %v1062
        %v1068 = vshll.u32 %v1047, 16
        %v1070 = vrot.slane %v1068, 1
        %v1071 = vsel %vm333, %v1066, %v1070
        %v1072 = vshrl.u32 %v1047, 16
        %v1074 = vor.u32 %v1072, %v1070
        %v1076 = vshll.u32 %v1048, 16
        %v1078 = vrot.slane %v1076, 1
        %v1079 = vsel %vm333, %v1074, %v1078
        %v1080 = vshrl.u32 %v1048, 16
        %v1082 = vor.u32 %v1080, %v1078
        %v1084 = vshll.u32 %v1049, 16
        %v1086 = vrot.slane %v1084, 1
        %v1087 = vsel %vm333, %v1082, %v1086
        %v1088 = vshrl.u32 %v1049, 16
        %v1090 = vor.u32 %v1088, %v1086
        %v1092 = vshll.u32 %v1050, 16
        %v1094 = vrot.slane %v1092, 1
        %v1095 = vsel %vm333, %v1090, %v1094
        %v1096 = vshrl.u32 %v1050, 16
        %v1098 = vor.u32 %v1096, %v1094
        %v1100 = vshll.u32 %v1051, 16
        %v1102 = vrot.slane %v1100, 1
        %v1103 = vsel %vm333, %v1098, %v1102
        %v1112 = vunpack.c.l.b16 %v1011
        %v1113 = vunpack.c.l.b16 %v1012
        %v1114 = vunpack.c.l.b16 %v1013
        %v1115 = vunpack.c.l.b16 %v1014
        %v1116 = vunpack.c.l.b16 %v1015
        %v1117 = vunpack.c.l.b16 %v1016
        %v1118 = vunpack.c.l.b16 %v1017
        %v1119 = vunpack.c.l.b16 %v1018
        %v1120 = vpack.c.b16 %v1113, %v1112
        %v1121 = vpack.c.b16 %v1115, %v1114
        %v1122 = vpack.c.b16 %v1117, %v1116
        %v1123 = vpack.c.b16 %v1119, %v1118
        %vm1128 = vcmask 523264
        %v1130 = vsel %vm1128, %v1063, 0
        %v1133 = vsel %vm1128, %v1071, 0
        %v1136 = vsel %vm1128, %v1079, 0
        %v1139 = vsel %vm1128, %v1087, 0
        %v1142 = vsel %vm1128, %v1095, 0
        %v1145 = vsel %vm1128, %v1103, 0
        %1147 = vmatprep.subr.bf16.mxu0 0
        %1148 = vmatpush1.bf16.msra.mxu0 %v1120
        %1149 = vmatprep.subr.bf16.mxu0 0
        %1150 = vmatpush1.bf16.msra.mxu0 %v1121
        %1151 = vmatprep.subr.bf16.mxu0 0
        %1152 = vmatpush1.bf16.msra.mxu0 %v1122
        %1153 = vmatprep.subr.bf16.mxu0 0
        %1154 = vmatpush1.bf16.msra.mxu0 %v1123
        %1155 = vmatprep.subr.bf16.mxu0 0
        %1156 = vmatpush1.bf16.msra.mxu0 0
        %1157 = vmatprep.subr.bf16.mxu0 0
        %1158 = vmatpush1.bf16.msra.mxu0 0
        %1159 = vmatprep.subr.bf16.mxu0 0
        %1160 = vmatpush1.bf16.msra.mxu0 0
        %1161 = vmatprep.subr.bf16.mxu0 0
        %1162 = vmatpush1.bf16.msra.mxu0 0
        %1163 = vmatprep.subr.bf16.mxu0 0
        %1164 = vmatpush1.bf16.msra.mxu0 0
        %1165 = vmatprep.subr.bf16.mxu0 0
        %1166 = vmatpush1.bf16.msra.mxu0 0
        %1167 = vmatprep.subr.bf16.mxu0 0
        %1168 = vmatpush1.bf16.msra.mxu0 0
        %1169 = vmatprep.subr.bf16.mxu0 0
        %1170 = vmatpush1.bf16.msra.mxu0 0
        %1171 = vmatprep.subr.bf16.mxu0 0
        %1172 = vmatpush1.bf16.msra.mxu0 0
        %1173 = vmatprep.subr.bf16.mxu0 0
        %1174 = vmatpush1.bf16.msra.mxu0 0
        %1175 = vmatprep.subr.bf16.mxu0 0
        %1176 = vmatpush1.bf16.msra.mxu0 0
        %1177 = vmatprep.subr.bf16.mxu0 0
        %1178 = vmatpush1.bf16.msra.mxu0 0
        %1179 = vmatprep.mubr.bf16.mxu0 0
        %1180 = vmatmul.mubr.bf16.gmra.mrb[0].mxu0 %v1130
        %v1181 = vpop.f32.mrb[0].mxu0
        %v1182 = vadd.f32 0.0, %v1181
        %v1183 = vpop.f32.mrb[0].mxu0
        %v1184 = vpop.f32.mrb[0].mxu0
        %v1185 = vadd.f32 0.0, %v1184
        %v1186 = vpop.f32.mrb[0].mxu0
        %1187 = vmatprep.mubr.bf16.mxu0 0
        %1188 = vmatmul.mubr.bf16.gmra.mrb[0].mxu0 %v1133
        %v1189 = vpop.f32.mrb[0].mxu0
        %v1190 = vadd.f32 0.0, %v1189
        %v1191 = vpop.f32.mrb[0].mxu0
        %v1192 = vpop.f32.mrb[0].mxu0
        %v1193 = vadd.f32 0.0, %v1192
        %v1194 = vpop.f32.mrb[0].mxu0
        %1195 = vmatprep.mubr.bf16.mxu0 0
        %1196 = vmatmul.mubr.bf16.gmra.mrb[0].mxu0 %v1136
        %v1197 = vpop.f32.mrb[0].mxu0
        %v1198 = vadd.f32 0.0, %v1197
        %v1199 = vpop.f32.mrb[0].mxu0
        %v1200 = vpop.f32.mrb[0].mxu0
        %v1201 = vadd.f32 0.0, %v1200
        %v1202 = vpop.f32.mrb[0].mxu0
        %1203 = vmatprep.mubr.bf16.mxu0 0
        %1204 = vmatmul.mubr.bf16.gmra.mrb[0].mxu0 %v1139
        %v1205 = vpop.f32.mrb[0].mxu0
        %v1206 = vadd.f32 0.0, %v1205
        %v1207 = vpop.f32.mrb[0].mxu0
        %v1208 = vpop.f32.mrb[0].mxu0
        %v1209 = vadd.f32 0.0, %v1208
        %v1210 = vpop.f32.mrb[0].mxu0
        %1211 = vmatprep.mubr.bf16.mxu0 0
        %1212 = vmatmul.mubr.bf16.gmra.mrb[0].mxu0 %v1142
        %v1213 = vpop.f32.mrb[0].mxu0
        %v1214 = vadd.f32 0.0, %v1213
        %v1215 = vpop.f32.mrb[0].mxu0
        %v1216 = vpop.f32.mrb[0].mxu0
        %v1217 = vadd.f32 0.0, %v1216
        %v1218 = vpop.f32.mrb[0].mxu0
        %1219 = vmatprep.mubr.bf16.mxu0 0
        %1220 = vmatmul.mubr.bf16.gmra.mrb[0].mxu0 %v1145
        %v1221 = vpop.f32.mrb[0].mxu0
        %v1222 = vadd.f32 0.0, %v1221
        %v1223 = vpop.f32.mrb[0].mxu0
        %v1224 = vpop.f32.mrb[0].mxu0
        %v1225 = vadd.f32 0.0, %v1224
        %v1226 = vpop.f32.mrb[0].mxu0
        %1227 = vdwg.mxu0
        %v1236 = vunpack.c.l.b16 %v1002
        %v1237 = vunpack.c.l.b16 %v1003
        %v1238 = vunpack.c.l.b16 %v1004
        %v1239 = vunpack.c.l.b16 %v1005
        %v1240 = vunpack.c.l.b16 %v1006
        %v1241 = vunpack.c.l.b16 %v1007
        %v1242 = vunpack.c.l.b16 %v1008
        %v1243 = vunpack.c.l.b16 %v1009
        %v1244 = vpack.c.b16 %v1237, %v1236
        %v1245 = vpack.c.b16 %v1239, %v1238
        %v1246 = vpack.c.b16 %v1241, %v1240
        %v1247 = vpack.c.b16 %v1243, %v1242
        %v1252 = vsel %vm1128, %v1045, 0
        %v1254 = vsel %vm1128, %v1046, 0
        %v1256 = vsel %vm1128, %v1047, 0
        %v1258 = vsel %vm1128, %v1048, 0
        %v1260 = vsel %vm1128, %v1049, 0
        %v1262 = vsel %vm1128, %v1050, 0
        %1264 = vmatprep.subr.bf16.mxu0 0
        %1265 = vmatpush1.bf16.msra.mxu0 %v1244
        %1266 = vmatprep.subr.bf16.mxu0 0
        %1267 = vmatpush1.bf16.msra.mxu0 %v1245
        %1268 = vmatprep.subr.bf16.mxu0 0
        %1269 = vmatpush1.bf16.msra.mxu0 %v1246
        %1270 = vmatprep.subr.bf16.mxu0 0
        %1271 = vmatpush1.bf16.msra.mxu0 %v1247
        %1272 = vmatprep.subr.bf16.mxu0 0
        %1273 = vmatpush1.bf16.msra.mxu0 0
        %1274 = vmatprep.subr.bf16.mxu0 0
        %1275 = vmatpush1.bf16.msra.mxu0 0
        %1276 = vmatprep.subr.bf16.mxu0 0
        %1277 = vmatpush1.bf16.msra.mxu0 0
        %1278 = vmatprep.subr.bf16.mxu0 0
        %1279 = vmatpush1.bf16.msra.mxu0 0
        %1280 = vmatprep.subr.bf16.mxu0 0
        %1281 = vmatpush1.bf16.msra.mxu0 0
        %1282 = vmatprep.subr.bf16.mxu0 0
        %1283 = vmatpush1.bf16.msra.mxu0 0
        %1284 = vmatprep.subr.bf16.mxu0 0
        %1285 = vmatpush1.bf16.msra.mxu0 0
        %1286 = vmatprep.subr.bf16.mxu0 0
        %1287 = vmatpush1.bf16.msra.mxu0 0
        %1288 = vmatprep.subr.bf16.mxu0 0
        %1289 = vmatpush1.bf16.msra.mxu0 0
        %1290 = vmatprep.subr.bf16.mxu0 0
        %1291 = vmatpush1.bf16.msra.mxu0 0
        %1292 = vmatprep.subr.bf16.mxu0 0
        %1293 = vmatpush1.bf16.msra.mxu0 0
        %1294 = vmatprep.subr.bf16.mxu0 0
        %1295 = vmatpush1.bf16.msra.mxu0 0
        %1296 = vmatprep.mubr.bf16.mxu0 0
        %1297 = vmatmul.mubr.bf16.gmra.mrb[0].mxu0 %v1252
        %v1298 = vpop.f32.mrb[0].mxu0
        %v1299 = vadd.f32 %v1182, %v1298
        %v1300 = vpop.f32.mrb[0].mxu0
        %v1301 = vpop.f32.mrb[0].mxu0
        %v1302 = vadd.f32 %v1185, %v1301
        %v1303 = vpop.f32.mrb[0].mxu0
        %1304 = vmatprep.mubr.bf16.mxu0 0
        %1305 = vmatmul.mubr.bf16.gmra.mrb[0].mxu0 %v1254
        %v1306 = vpop.f32.mrb[0].mxu0
        %v1307 = vadd.f32 %v1190, %v1306
        %v1308 = vpop.f32.mrb[0].mxu0
        %v1309 = vpop.f32.mrb[0].mxu0
        %v1310 = vadd.f32 %v1193, %v1309
        %v1311 = vpop.f32.mrb[0].mxu0
        %1312 = vmatprep.mubr.bf16.mxu0 0
        %1313 = vmatmul.mubr.bf16.gmra.mrb[0].mxu0 %v1256
        %v1314 = vpop.f32.mrb[0].mxu0
        %v1315 = vadd.f32 %v1198, %v1314
        %v1316 = vpop.f32.mrb[0].mxu0
        %v1317 = vpop.f32.mrb[0].mxu0
        %v1318 = vadd.f32 %v1201, %v1317
        %v1319 = vpop.f32.mrb[0].mxu0
        %1320 = vmatprep.mubr.bf16.mxu0 0
        %1321 = vmatmul.mubr.bf16.gmra.mrb[0].mxu0 %v1258
        %v1322 = vpop.f32.mrb[0].mxu0
        %v1323 = vadd.f32 %v1206, %v1322
        %v1324 = vpop.f32.mrb[0].mxu0
        %v1325 = vpop.f32.mrb[0].mxu0
        %v1326 = vadd.f32 %v1209, %v1325
        %v1327 = vpop.f32.mrb[0].mxu0
        %1328 = vmatprep.mubr.bf16.mxu0 0
        %1329 = vmatmul.mubr.bf16.gmra.mrb[0].mxu0 %v1260
        %v1330 = vpop.f32.mrb[0].mxu0
        %v1331 = vadd.f32 %v1214, %v1330
        %v1332 = vpop.f32.mrb[0].mxu0
        %v1333 = vpop.f32.mrb[0].mxu0
        %v1334 = vadd.f32 %v1217, %v1333
        %v1335 = vpop.f32.mrb[0].mxu0
        %1336 = vmatprep.mubr.bf16.mxu0 0
        %1337 = vmatmul.mubr.bf16.gmra.mrb[0].mxu0 %v1262
        %v1338 = vpop.f32.mrb[0].mxu0
        %v1339 = vadd.f32 %v1222, %v1338
        %v1340 = vpop.f32.mrb[0].mxu0
        %v1341 = vpop.f32.mrb[0].mxu0
        %v1342 = vadd.f32 %v1225, %v1341
        %v1343 = vpop.f32.mrb[0].mxu0
        %1344 = vdwg.mxu0
        %s1345 = scalar_lea.vmem %s3, 64
        %v1346 = vld [vmem:[%s1345] sm:$0xf]
        %v1347 = vld [vmem:[%s1345 + $0x4] sm:$0xf]
        %v1348 = vld [vmem:[%s1345 + $0x8] sm:$0xf]
        %v1349 = vld [vmem:[%s1345 + $0xc] sm:$0xf]
        %v1350 = vld [vmem:[%s1345 + $0x10] sm:$0xf]
        %v1351 = vld [vmem:[%s1345 + $0x14] sm:$0xf]
        %v1352 = vld [vmem:[%s1345 + $0x18] sm:$0xf]
        %v1353 = vld [vmem:[%s1345 + $0x1c] sm:$0xf]
        %v1354 = vrot.slane %v1045, 1
        %v1355 = vrot.slane %v1046, 1
        %v1356 = vsel %vm608, %v1354, %v1355
        %v1357 = vrot.slane %v1047, 1
        %v1358 = vsel %vm608, %v1355, %v1357
        %v1359 = vrot.slane %v1048, 1
        %v1360 = vsel %vm608, %v1357, %v1359
        %v1361 = vrot.slane %v1049, 1
        %v1362 = vsel %vm608, %v1359, %v1361
        %v1363 = vrot.slane %v1050, 1
        %v1364 = vsel %vm608, %v1361, %v1363
        %v1365 = vrot.slane %v1051, 1
        %v1366 = vsel %vm608, %v1363, %v1365
        %v1375 = vunpack.c.l.b16 %v1346
        %v1376 = vunpack.c.l.b16 %v1347
        %v1377 = vunpack.c.l.b16 %v1348
        %v1378 = vunpack.c.l.b16 %v1349
        %v1379 = vunpack.c.l.b16 %v1350
        %v1380 = vunpack.c.l.b16 %v1351
        %v1381 = vunpack.c.l.b16 %v1352
        %v1382 = vunpack.c.l.b16 %v1353
        %v1383 = vpack.c.b16 %v1376, %v1375
        %v1384 = vpack.c.b16 %v1378, %v1377
        %v1385 = vpack.c.b16 %v1380, %v1379
        %v1386 = vpack.c.b16 %v1382, %v1381
        %v1392 = vsel %vm1128, %v1356, 0
        %v1395 = vsel %vm1128, %v1358, 0
        %v1398 = vsel %vm1128, %v1360, 0
        %v1401 = vsel %vm1128, %v1362, 0
        %v1404 = vsel %vm1128, %v1364, 0
        %v1407 = vsel %vm1128, %v1366, 0
        %1409 = vmatprep.subr.bf16.mxu0 0
        %1410 = vmatpush1.bf16.msra.mxu0 %v1383
        %1411 = vmatprep.subr.bf16.mxu0 0
        %1412 = vmatpush1.bf16.msra.mxu0 %v1384
        %1413 = vmatprep.subr.bf16.mxu0 0
        %1414 = vmatpush1.bf16.msra.mxu0 %v1385
        %1415 = vmatprep.subr.bf16.mxu0 0
        %1416 = vmatpush1.bf16.msra.mxu0 %v1386
        %1417 = vmatprep.subr.bf16.mxu0 0
        %1418 = vmatpush1.bf16.msra.mxu0 0
        %1419 = vmatprep.subr.bf16.mxu0 0
        %1420 = vmatpush1.bf16.msra.mxu0 0
        %1421 = vmatprep.subr.bf16.mxu0 0
        %1422 = vmatpush1.bf16.msra.mxu0 0
        %1423 = vmatprep.subr.bf16.mxu0 0
        %1424 = vmatpush1.bf16.msra.mxu0 0
        %1425 = vmatprep.subr.bf16.mxu0 0
        %1426 = vmatpush1.bf16.msra.mxu0 0
        %1427 = vmatprep.subr.bf16.mxu0 0
        %1428 = vmatpush1.bf16.msra.mxu0 0
        %1429 = vmatprep.subr.bf16.mxu0 0
        %1430 = vmatpush1.bf16.msra.mxu0 0
        %1431 = vmatprep.subr.bf16.mxu0 0
        %1432 = vmatpush1.bf16.msra.mxu0 0
        %1433 = vmatprep.subr.bf16.mxu0 0
        %1434 = vmatpush1.bf16.msra.mxu0 0
        %1435 = vmatprep.subr.bf16.mxu0 0
        %1436 = vmatpush1.bf16.msra.mxu0 0
        %1437 = vmatprep.subr.bf16.mxu0 0
        %1438 = vmatpush1.bf16.msra.mxu0 0
        %1439 = vmatprep.subr.bf16.mxu0 0
        %1440 = vmatpush1.bf16.msra.mxu0 0
        %1441 = vmatprep.mubr.bf16.mxu0 0
        %1442 = vmatmul.mubr.bf16.gmra.mrb[0].mxu0 %v1392
        %v1443 = vpop.f32.mrb[0].mxu0
        %v1444 = vadd.f32 0.0, %v1443
        %v1445 = vpop.f32.mrb[0].mxu0
        %v1446 = vpop.f32.mrb[0].mxu0
        %v1447 = vadd.f32 0.0, %v1446
        %v1448 = vpop.f32.mrb[0].mxu0
        %1449 = vmatprep.mubr.bf16.mxu0 0
        %1450 = vmatmul.mubr.bf16.gmra.mrb[0].mxu0 %v1395
        %v1451 = vpop.f32.mrb[0].mxu0
        %v1452 = vadd.f32 0.0, %v1451
        %v1453 = vpop.f32.mrb[0].mxu0
        %v1454 = vpop.f32.mrb[0].mxu0
        %v1455 = vadd.f32 0.0, %v1454
        %v1456 = vpop.f32.mrb[0].mxu0
        %1457 = vmatprep.mubr.bf16.mxu0 0
        %1458 = vmatmul.mubr.bf16.gmra.mrb[0].mxu0 %v1398
        %v1459 = vpop.f32.mrb[0].mxu0
        %v1460 = vadd.f32 0.0, %v1459
        %v1461 = vpop.f32.mrb[0].mxu0
        %v1462 = vpop.f32.mrb[0].mxu0
        %v1463 = vadd.f32 0.0, %v1462
        %v1464 = vpop.f32.mrb[0].mxu0
        %1465 = vmatprep.mubr.bf16.mxu0 0
        %1466 = vmatmul.mubr.bf16.gmra.mrb[0].mxu0 %v1401
        %v1467 = vpop.f32.mrb[0].mxu0
        %v1468 = vadd.f32 0.0, %v1467
        %v1469 = vpop.f32.mrb[0].mxu0
        %v1470 = vpop.f32.mrb[0].mxu0
        %v1471 = vadd.f32 0.0, %v1470
        %v1472 = vpop.f32.mrb[0].mxu0
        %1473 = vmatprep.mubr.bf16.mxu0 0
        %1474 = vmatmul.mubr.bf16.gmra.mrb[0].mxu0 %v1404
        %v1475 = vpop.f32.mrb[0].mxu0
        %v1476 = vadd.f32 0.0, %v1475
        %v1477 = vpop.f32.mrb[0].mxu0
        %v1478 = vpop.f32.mrb[0].mxu0
        %v1479 = vadd.f32 0.0, %v1478
        %v1480 = vpop.f32.mrb[0].mxu0
        %1481 = vmatprep.mubr.bf16.mxu0 0
        %1482 = vmatmul.mubr.bf16.gmra.mrb[0].mxu0 %v1407
        %v1483 = vpop.f32.mrb[0].mxu0
        %v1484 = vadd.f32 0.0, %v1483
        %v1485 = vpop.f32.mrb[0].mxu0
        %v1486 = vpop.f32.mrb[0].mxu0
        %v1487 = vadd.f32 0.0, %v1486
        %v1488 = vpop.f32.mrb[0].mxu0
        %1489 = vdwg.mxu0
        %v1490 = vadd.f32 %v1299, %v1444
        %v1491 = vadd.f32 %v1302, %v1447
        %v1492 = vadd.f32 %v1307, %v1452
        %v1493 = vadd.f32 %v1310, %v1455
        %v1494 = vadd.f32 %v1315, %v1460
        %v1495 = vadd.f32 %v1318, %v1463
        %v1496 = vadd.f32 %v1323, %v1468
        %v1497 = vadd.f32 %v1326, %v1471
        %v1498 = vadd.f32 %v1331, %v1476
        %v1499 = vadd.f32 %v1334, %v1479
        %v1500 = vadd.f32 %v1339, %v1484
        %v1501 = vadd.f32 %v1342, %v1487
        %v1502 = vld [vmem:[%s4] sm:$0x1]
        %v1504 = vlaneseq
        %v1505 = vshrl.u32 %v1504, 7
        %v1506 = vsub.s32 0, %v1505
        %v1507 = vrot.slane %v1502, %v1506
        %v1509 = vadd.f32 %v1490, %v1507
        %v1510 = vadd.f32 %v1491, %v1507
        %v1511 = vadd.f32 %v1492, %v1507
        %v1512 = vadd.f32 %v1493, %v1507
        %v1513 = vadd.f32 %v1494, %v1507
        %v1514 = vadd.f32 %v1495, %v1507
        %v1515 = vadd.f32 %v1496, %v1507
        %v1516 = vadd.f32 %v1497, %v1507
        %v1517 = vadd.f32 %v1498, %v1507
        %v1518 = vadd.f32 %v1499, %v1507
        %v1519 = vadd.f32 %v1500, %v1507
        %v1520 = vadd.f32 %v1501, %v1507
        %v1521 = vld [vmem:[%s5] sm:$0xf]
        %v1522 = vld [vmem:[%s5 + $0x4] sm:$0xf]
        %v1523 = vld [vmem:[%s5 + $0x8] sm:$0xf]
        %v1524 = vld [vmem:[%s5 + $0xc] sm:$0xf]
        %v1525 = vld [vmem:[%s6] sm:$0x1]
        %v1527 = vlaneseq
        %v1528 = vshrl.u32 %v1527, 7
        %v1529 = vsub.s32 0, %v1528
        %v1530 = vrot.slane %v1525, %v1529
        %v1536 = vunpack.c.l.b16 %v1521
        %v1537 = vunpack.c.l.b16 %v1522
        %v1538 = vunpack.c.l.b16 %v1523
        %v1539 = vunpack.c.l.b16 %v1524
        %v1540 = vpack.c.b16 %v1537, %v1536
        %v1541 = vpack.c.b16 %v1539, %v1538
        %1544 = vmatprep.subr.bf16.mxu0 0
        %1545 = vmatpush1.bf16.msra.mxu0 %v1540
        %1546 = vmatprep.subr.bf16.mxu0 0
        %1547 = vmatpush1.bf16.msra.mxu0 %v1541
        %1548 = vmatprep.subr.bf16.mxu0 0
        %1549 = vmatpush1.bf16.msra.mxu0 0
        %1550 = vmatprep.subr.bf16.mxu0 0
        %1551 = vmatpush1.bf16.msra.mxu0 0
        %1552 = vmatprep.subr.bf16.mxu0 0
        %1553 = vmatpush1.bf16.msra.mxu0 0
        %1554 = vmatprep.subr.bf16.mxu0 0
        %1555 = vmatpush1.bf16.msra.mxu0 0
        %1556 = vmatprep.subr.bf16.mxu0 0
        %1557 = vmatpush1.bf16.msra.mxu0 0
        %1558 = vmatprep.subr.bf16.mxu0 0
        %1559 = vmatpush1.bf16.msra.mxu0 0
        %1560 = vmatprep.subr.bf16.mxu0 0
        %1561 = vmatpush1.bf16.msra.mxu0 0
        %1562 = vmatprep.subr.bf16.mxu0 0
        %1563 = vmatpush1.bf16.msra.mxu0 0
        %1564 = vmatprep.subr.bf16.mxu0 0
        %1565 = vmatpush1.bf16.msra.mxu0 0
        %1566 = vmatprep.subr.bf16.mxu0 0
        %1567 = vmatpush1.bf16.msra.mxu0 0
        %1568 = vmatprep.subr.bf16.mxu0 0
        %1569 = vmatpush1.bf16.msra.mxu0 0
        %1570 = vmatprep.subr.bf16.mxu0 0
        %1571 = vmatpush1.bf16.msra.mxu0 0
        %1572 = vmatprep.subr.bf16.mxu0 0
        %1573 = vmatpush1.bf16.msra.mxu0 0
        %1574 = vmatprep.subr.bf16.mxu0 0
        %1575 = vmatpush1.bf16.msra.mxu0 0
        %1576 = vmatprep.mubr.bf16.mxu0 0
        %1577 = vmatmul.mubr.bf16.gmra.mrb[0].mxu0 %v400
        %v1578 = vpop.f32.mrb[0].mxu0
        %v1579 = vadd.f32 %v1530, %v1578
        %v1580 = vpop.f32.mrb[0].mxu0
        %v1581 = vpop.f32.mrb[0].mxu0
        %v1582 = vadd.f32 %v1530, %v1581
        %v1583 = vpop.f32.mrb[0].mxu0
        %1584 = vmatprep.mubr.bf16.mxu0 0
        %1585 = vmatmul.mubr.bf16.gmra.mrb[0].mxu0 %v403
        %v1586 = vpop.f32.mrb[0].mxu0
        %v1587 = vadd.f32 %v1530, %v1586
        %v1588 = vpop.f32.mrb[0].mxu0
        %v1589 = vpop.f32.mrb[0].mxu0
        %v1590 = vadd.f32 %v1530, %v1589
        %v1591 = vpop.f32.mrb[0].mxu0
        %1592 = vmatprep.mubr.bf16.mxu0 0
        %1593 = vmatmul.mubr.bf16.gmra.mrb[0].mxu0 %v406
        %v1594 = vpop.f32.mrb[0].mxu0
        %v1595 = vadd.f32 %v1530, %v1594
        %v1596 = vpop.f32.mrb[0].mxu0
        %v1597 = vpop.f32.mrb[0].mxu0
        %v1598 = vadd.f32 %v1530, %v1597
        %v1599 = vpop.f32.mrb[0].mxu0
        %1600 = vmatprep.mubr.bf16.mxu0 0
        %1601 = vmatmul.mubr.bf16.gmra.mrb[0].mxu0 %v409
        %v1602 = vpop.f32.mrb[0].mxu0
        %v1603 = vadd.f32 %v1530, %v1602
        %v1604 = vpop.f32.mrb[0].mxu0
        %v1605 = vpop.f32.mrb[0].mxu0
        %v1606 = vadd.f32 %v1530, %v1605
        %v1607 = vpop.f32.mrb[0].mxu0
        %1608 = vmatprep.mubr.bf16.mxu0 0
        %1609 = vmatmul.mubr.bf16.gmra.mrb[0].mxu0 %v412
        %v1610 = vpop.f32.mrb[0].mxu0
        %v1611 = vadd.f32 %v1530, %v1610
        %v1612 = vpop.f32.mrb[0].mxu0
        %v1613 = vpop.f32.mrb[0].mxu0
        %v1614 = vadd.f32 %v1530, %v1613
        %v1615 = vpop.f32.mrb[0].mxu0
        %1616 = vmatprep.mubr.bf16.mxu0 0
        %1617 = vmatmul.mubr.bf16.gmra.mrb[0].mxu0 %v415
        %v1618 = vpop.f32.mrb[0].mxu0
        %v1619 = vadd.f32 %v1530, %v1618
        %v1620 = vpop.f32.mrb[0].mxu0
        %v1621 = vpop.f32.mrb[0].mxu0
        %v1622 = vadd.f32 %v1530, %v1621
        %v1623 = vpop.f32.mrb[0].mxu0
        %1624 = vdwg.mxu0
        %v1625 = vadd.f32 %v1509, %v1579
        %v1626 = vadd.f32 %v1510, %v1582
        %v1627 = vadd.f32 %v1511, %v1587
        %v1628 = vadd.f32 %v1512, %v1590
        %v1629 = vadd.f32 %v1513, %v1595
        %v1630 = vadd.f32 %v1514, %v1598
        %v1631 = vadd.f32 %v1515, %v1603
        %v1632 = vadd.f32 %v1516, %v1606
        %v1633 = vadd.f32 %v1517, %v1611
        %v1634 = vadd.f32 %v1518, %v1614
        %v1635 = vadd.f32 %v1519, %v1619
        %v1636 = vadd.f32 %v1520, %v1622
        %1637 = vst.msk [vmem:[#allocation3] sm:$0xff] %vm1128, %v1625
        %1638 = vst.msk [vmem:[#allocation3 + $0x8] sm:$0xff] %vm1128, %v1626
        %1639 = vst.msk [vmem:[#allocation3 + $0x10] sm:$0xff] %vm1128, %v1627
        %1640 = vst.msk [vmem:[#allocation3 + $0x18] sm:$0xff] %vm1128, %v1628
        %1641 = vst.msk [vmem:[#allocation3 + $0x20] sm:$0xff] %vm1128, %v1629
        %1642 = vst.msk [vmem:[#allocation3 + $0x28] sm:$0xff] %vm1128, %v1630
        %1643 = vst.msk [vmem:[#allocation3 + $0x30] sm:$0xff] %vm1128, %v1631
        %1644 = vst.msk [vmem:[#allocation3 + $0x38] sm:$0xff] %vm1128, %v1632
        %1645 = vst.msk [vmem:[#allocation3 + $0x40] sm:$0xff] %vm1128, %v1633
        %1646 = vst.msk [vmem:[#allocation3 + $0x48] sm:$0xff] %vm1128, %v1634
        %1647 = vst.msk [vmem:[#allocation3 + $0x50] sm:$0xff] %vm1128, %v1635
        %1648 = vst.msk [vmem:[#allocation3 + $0x58] sm:$0xff] %vm1128, %v1636
        %v1649 = vld [vmem:[#allocation3] ss:$3 sm:$0xff]
        %s1650 = scalar_lea.vmem [#allocation3], 24
        %v1651 = vld [vmem:[%s1650] ss:$3 sm:$0xff]
        %s1652 = scalar_lea.vmem [#allocation3], 48
        %v1653 = vld [vmem:[%s1652] ss:$3 sm:$0xff]
        %s1654 = scalar_lea.vmem [#allocation3], 72
        %v1655 = vld [vmem:[%s1654] ss:$3 sm:$0xff]
        %s1656 = scalar_lea.vmem [#allocation3], 1
        %v1657 = vld [vmem:[%s1656] ss:$3 sm:$0xff]
        %s1658 = scalar_lea.vmem [#allocation3], 25
        %v1659 = vld [vmem:[%s1658] ss:$3 sm:$0xff]
        %s1660 = scalar_lea.vmem [#allocation3], 49
        %v1661 = vld [vmem:[%s1660] ss:$3 sm:$0xff]
        %s1662 = scalar_lea.vmem [#allocation3], 73
        %v1663 = vld [vmem:[%s1662] ss:$3 sm:$0xff]
        %s1664 = scalar_lea.vmem [#allocation3], 2
        %v1665 = vld [vmem:[%s1664] ss:$3 sm:$0xff]
        %s1666 = scalar_lea.vmem [#allocation3], 26
        %v1667 = vld [vmem:[%s1666] ss:$3 sm:$0xff]
        %s1668 = scalar_lea.vmem [#allocation3], 50
        %v1669 = vld [vmem:[%s1668] ss:$3 sm:$0xff]
        %s1670 = scalar_lea.vmem [#allocation3], 74
        %v1671 = vld [vmem:[%s1670] ss:$3 sm:$0xff]
        %v1672 = vmax.f32 %v1649, %v1657
        %v1673 = vmax.f32 %v1651, %v1659
        %v1674 = vmax.f32 %v1653, %v1661
        %v1675 = vmax.f32 %v1655, %v1663
        %v1676 = vmax.f32 %v1672, %v1665
        %v1677 = vmax.f32 %v1673, %v1667
        %v1678 = vmax.f32 %v1674, %v1669
        %v1679 = vmax.f32 %v1675, %v1671
        %1680 = vst.msk [vmem:[%s271] sm:$0xff] %vm1128, %v1676
        %1681 = vst.msk [vmem:[%s271 + $0x8] sm:$0xff] %vm1128, %v1677
        %1682 = vst.msk [vmem:[%s271 + $0x10] sm:$0xff] %vm1128, %v1678
        %1683 = vst.msk [vmem:[%s271 + $0x18] sm:$0xff] %vm1128, %v1679
        %s1684 = sand.u32 %s181, 1
        %s1685 = scalar_lea.sflag [#allocation5], %s1684
        %s1686 = sand.u32 %s181, 1
        %s1687 = smul.addr %s1686, 32
        %s1688 = scalar_lea.vmem [#allocation4], %s1687
        // Predicated region
        $region49: #{residual_block_forward.1} parent=47 // pred_check
          %p1689 = pneg %p191
        $region50: #{residual_block_forward.1} parent=47 // pred_check_branch
          %1691 = sbr.rel (%p1689) target = $region52
        $region51: #{residual_block_forward.1} parent=47 // pred_region
          %s1693 = ssub.s32 512, 512
          %1694 = vsyncadd %s1685, %s1693
          %s1695 = smul.addr %s21, 4
          %s1696 = smul.addr %s1695, 128
          %s1697 = scalar_lea.hbm %s7, %s1696
          %s1698 = sshll.u32 %s1688, 4
          %s1699 = int_to_ptr.vmem [resolvable:$true] %s1698
          %1704 = dma.vmem_to_hbm [thread:$0]  %s1699, 512, %s1697, %s1685, 128, 128, 8
        $region52: #{residual_block_forward.1} parent=47 // pred_fallthru
          _
      $region48: #{residual_block_forward.1} parent=5 // pred_fallthru
        _
      %p1705 = scmp.le.s32.totalorder 2, %s16
      // Predicated region
      $region53: #{residual_block_forward.1} parent=5 // pred_check
        %p1706 = pneg %p1705
      $region54: #{residual_block_forward.1} parent=5 // pred_check_branch
        %1708 = sbr.rel (%p1706) target = $region56
      $region55: #{residual_block_forward.1} parent=5 // pred_region
        %s1709 = ssub.s32 %s16, 2
        // Predicated region
        $region57: #{residual_block_forward.1} parent=55 // pred_check
          %p1710 = pneg %p197
        $region58: #{residual_block_forward.1} parent=55 // pred_check_branch
          %1712 = sbr.rel (%p1710) target = $region60
        $region59: #{residual_block_forward.1} parent=55 // pred_region
          %s1713 = sand.u32 %s182, 1
          %s1714 = scalar_lea.sflag [#allocation5], %s1713
          %s1715 = sand.u32 %s182, 1
          %s1716 = smul.addr %s1715, 32
          %s1717 = scalar_lea.vmem [#allocation4], %s1716
          %1718 = dma.done %s1714, 512
        $region60: #{residual_block_forward.1} parent=55 // pred_fallthru
          _
      $region56: #{residual_block_forward.1} parent=5 // pred_fallthru
        _
    $region6: #{residual_block_forward.1} parent=1 // loop_footer
      %s20 = sadd.s32 1, %s16
    $region7: #{residual_block_forward.1} parent=1 // loop_footer_branch
      %15 = sbr.rel target = $region3
    $region8: #{residual_block_forward.1} parent=1 // loop_exit
      _
    %1719 = vsyncpa [#allocation5], 1
    %s1720 = scalar_lea.sflag [#allocation5], 1
    %1721 = vsyncpa %s1720, 1

</llo_original>
